<compile_context>
chip_gen: v7x
topology: tpu7x:2x2x1
jax: 0.10.0
libtpu: 0.0.40
codegen_flags: <defaults>
</compile_context>

<pallas_src>
import functools

import jax
import jax.numpy as jnp
from jax.experimental import pallas as pl
from jax.experimental.pallas import tpu as pltpu


def _round_up(x, m):
    return (x + m - 1) // m * m


@functools.lru_cache(maxsize=None)
def _vmem_limit_bytes():
    """Generation-aware scoped-VMEM limit (v7x: 64 MiB/TC, v5e/v6e: 128 MiB)."""
    cap = 128 * 1024 * 1024
    try:
        info = pltpu.get_tpu_info()
        cap = int(getattr(info, "vmem_capacity_bytes", cap)) or cap
    except Exception:
        pass
    # ~85% of physical VMEM, capped at 100 MiB (v7x -> ~54 MiB, v5e/v6e -> 100 MiB).
    return int(min(int(cap * 0.85), 100 * 1024 * 1024))


def _compiler_params(dim_sem):
    return pltpu.CompilerParams(
        dimension_semantics=dim_sem,
        vmem_limit_bytes=_vmem_limit_bytes(),
    )


_MAX_M_ROWS = 2048  # target flattened output rows per grid step


# ---------------------------------------------------------------------------
# Kernel 1: fused 3x3 conv + BN (+residual) (+ReLU), shifted-window, any stride
# ---------------------------------------------------------------------------
# x_ref : (s, Hq*Wo8, 3*Cin) bf16  -- width-fused, column-subsampled, padded
# w_ref : (3, 3*Cin, TN)     bf16  -- BN scale folded in
# b_ref : (1, TN)            f32   -- BN bias
# r_ref : (TM, TN)           bf16  -- optional residual (already in out layout)
# o_ref : (TM, TN)           bf16
def _conv3x3_kernel(x_ref, w_ref, b_ref, o_ref, *, taps, tm, wo8, relu):
    base = pl.program_id(1) * tm
    acc = None
    for t, (dq, dr) in enumerate(taps):
        start = pl.multiple_of(base + dq * wo8, 8)
        xt = x_ref[dr, pl.ds(start, tm), :]
        part = jnp.dot(xt, w_ref[t], preferred_element_type=jnp.float32)
        acc = part if acc is None else acc + part
    out = acc + b_ref[...]
    if relu:
        out = jnp.maximum(out, 0.0)
    o_ref[...] = out.astype(o_ref.dtype)


def _conv3x3_res_kernel(x_ref, w_ref, b_ref, r_ref, o_ref, *, taps, tm, wo8, relu):
    base = pl.program_id(1) * tm
    acc = None
    for t, (dq, dr) in enumerate(taps):
        start = pl.multiple_of(base + dq * wo8, 8)
        xt = x_ref[dr, pl.ds(start, tm), :]
        part = jnp.dot(xt, w_ref[t], preferred_element_type=jnp.float32)
        acc = part if acc is None else acc + part
    out = acc + b_ref[...] + r_ref[...].astype(jnp.float32)
    if relu:
        out = jnp.maximum(out, 0.0)
    o_ref[...] = out.astype(o_ref.dtype)


def conv3x3_bn_act(x, w_torch, scale, bias, *, stride, dilation, relu, residual=None):
    """Fused 3x3 conv (any stride/dilation, pad=dilation) + BN (+res) (+ReLU).

    x: NHWC bf16.  Returns NHWC bf16 of shape (N, Ho, Wo, Cout).
    """
    N, H, W, Cin = x.shape
    Cout, Cin_w, KH, KW = w_torch.shape
    assert (KH, KW) == (3, 3) and Cin_w == Cin
    s, d = int(stride), int(dilation)
    p = d  # conv3x3 padding rule: (3 + (d-1)*2 - 1)//2 == d
    Ho = (H + 2 * p - 2 * d - 1) // s + 1
    Wo = (W + 2 * p - 2 * d - 1) // s + 1
    Wo8 = _round_up(Wo, 8)
    K = 3 * Cin

    # --- activation prep: pad, width-fuse the kw taps, subsample columns ---
    Hpad = H + 2 * p
    Hq = -(-Hpad // s)  # ceil(Hpad / s)
    xb = x.astype(jnp.bfloat16)
    xp = jnp.pad(xb, ((0, 0), (p, Hq * s - H - p), (p, p), (0, 0)))
    slabs = [xp[:, :, kw * d: kw * d + s * (Wo - 1) + 1: s, :] for kw in range(3)]
    xs = jnp.concatenate(slabs, axis=-1)                       # (N, Hq*s, Wo, K)
    if Wo8 != Wo:
        xs = jnp.pad(xs, ((0, 0), (0, 0), (0, Wo8 - Wo), (0, 0)))
    # Row r-phase to a small leading axis so every tap is a contiguous,
    # sublane-aligned slice (free reshape when stride == 1).
    xs = xs.reshape(N, Hq, s, Wo8, K)
    xs = jnp.transpose(xs, (2, 0, 1, 3, 4)).reshape(s, N * Hq * Wo8, K)

    # --- weights: fold BN scale in f32, single bf16 cast; bias stays f32 ---
    wf = (jnp.transpose(w_torch, (2, 3, 1, 0)).astype(jnp.float32)
          * scale.astype(jnp.float32))                          # (3, 3, Cin, Cout)
    wf = wf.reshape(3, K, Cout)                                 # K index = kw*Cin + c
    if Cout <= 256:
        TN, Coutp = Cout, Cout
    else:
        TN = 256
        Coutp = _round_up(Cout, TN)
    bias_p = bias
    if Coutp != Cout:
        wf = jnp.pad(wf, ((0, 0), (0, 0), (0, Coutp - Cout)))
        bias_p = jnp.pad(bias, (0, Coutp - Cout))
    wq = wf.astype(jnp.bfloat16)
    b2 = bias_p.reshape(1, Coutp).astype(jnp.float32)

    # --- spatial (M) tiling over output rows ---
    TMh = max(1, min(Ho, _MAX_M_ROWS // Wo8))
    while Ho % TMh:
        TMh -= 1
    TM = TMh * Wo8
    MB = Ho // TMh

    # padded input row for output row ho, tap kh:  s*ho + kh*d == s*(ho+dq) + dr
    taps = tuple(((kh * d) // s, (kh * d) % s) for kh in range(3))

    in_specs = [
        pl.BlockSpec((s, Hq * Wo8, K), lambda n, m, j: (0, n, 0)),
        pl.BlockSpec((3, K, TN), lambda n, m, j: (0, 0, j)),
        pl.BlockSpec((1, TN), lambda n, m, j: (0, j)),
    ]
    args = [xs, wq, b2]
    res_bytes = 0
    if residual is not None:
        rp = jnp.pad(residual.astype(jnp.bfloat16),
                     ((0, 0), (0, 0), (0, Wo8 - Wo), (0, Coutp - Cout)))
        rp = rp.reshape(N * Ho * Wo8, Coutp)
        in_specs.append(pl.BlockSpec((TM, TN), lambda n, m, j: (n * MB + m, j)))
        args.append(rp)
        res_bytes = rp.size * 2
        kernel = functools.partial(_conv3x3_res_kernel, taps=taps, tm=TM,
                                   wo8=Wo8, relu=relu)
    else:
        kernel = functools.partial(_conv3x3_kernel, taps=taps, tm=TM,
                                   wo8=Wo8, relu=relu)

    flops = 2 * N * Ho * Wo8 * (3 * K) * Coutp
    bytes_accessed = (xs.size * 2 + wq.size * 2 + b2.size * 4
                      + N * Ho * Wo8 * Coutp * 2 + res_bytes)

    out = pl.pallas_call(
        kernel,
        out_shape=jax.ShapeDtypeStruct((N * Ho * Wo8, Coutp), jnp.bfloat16),
        grid=(N, MB, Coutp // TN),
        in_specs=in_specs,
        out_specs=pl.BlockSpec((TM, TN), lambda n, m, j: (n * MB + m, j)),
        compiler_params=_compiler_params(("parallel", "parallel", "parallel")),
        cost_estimate=pl.CostEstimate(flops=int(flops), transcendentals=0,
                                      bytes_accessed=int(bytes_accessed)),
    )(*args)

    return out.reshape(N, Ho, Wo8, Coutp)[:, :, :Wo, :Cout]


# ---------------------------------------------------------------------------
# Kernel 2: tiled (M, N, K) matmul + BN epilogue (1x1 downsample conv)
# ---------------------------------------------------------------------------
def _matmul_bn_act_kernel(x_ref, w_ref, b_ref, o_ref, acc_ref, *, relu):
    @pl.when(pl.program_id(2) == 0)
    def _():
        acc_ref[...] = jnp.zeros_like(acc_ref)

    acc_ref[...] += jnp.dot(x_ref[...], w_ref[...],
                            preferred_element_type=jnp.float32)

    @pl.when(pl.program_id(2) == pl.num_programs(2) - 1)
    def _():
        out = acc_ref[...] + b_ref[...]
        if relu:
            out = jnp.maximum(out, 0.0)
        o_ref[...] = out.astype(o_ref.dtype)


def matmul_bn_act(lhs, rhs_f32, bias, relu):
    """out = act(lhs @ rhs + bias); lhs bf16 (M, K), rhs f32 (K, Cout) BN-folded."""
    M, K = lhs.shape
    Cout = rhs_f32.shape[1]

    if Cout <= 256:
        TN, Coutp = Cout, Cout
    else:
        TN = 256
        Coutp = _round_up(Cout, TN)
    TM = min(512, _round_up(M, 16))
    Mp = _round_up(M, TM)
    Kp = _round_up(K, 128)
    TK = Kp
    if Kp > 1024:
        TK = 128
        for cand in range(1024, 0, -128):
            if Kp % cand == 0:
                TK = cand
                break

    lhs_p = jnp.pad(lhs.astype(jnp.bfloat16), ((0, Mp - M), (0, Kp - K)))
    rhs_p = jnp.pad(rhs_f32, ((0, Kp - K), (0, Coutp - Cout))).astype(jnp.bfloat16)
    b_p = jnp.pad(bias, (0, Coutp - Cout)).reshape(1, Coutp).astype(jnp.float32)

    flops = 2 * Mp * Kp * Coutp
    bytes_accessed = lhs_p.size * 2 + rhs_p.size * 2 + b_p.size * 4 + Mp * Coutp * 2

    out = pl.pallas_call(
        functools.partial(_matmul_bn_act_kernel, relu=relu),
        out_shape=jax.ShapeDtypeStruct((Mp, Coutp), jnp.bfloat16),
        grid=(Mp // TM, Coutp // TN, Kp // TK),
        in_specs=[
            pl.BlockSpec((TM, TK), lambda i, j, k: (i, k)),
            pl.BlockSpec((TK, TN), lambda i, j, k: (k, j)),
            pl.BlockSpec((1, TN), lambda i, j, k: (0, j)),
        ],
        out_specs=pl.BlockSpec((TM, TN), lambda i, j, k: (i, j)),
        scratch_shapes=[pltpu.VMEM((TM, TN), jnp.float32)],
        compiler_params=_compiler_params(("parallel", "parallel", "arbitrary")),
        cost_estimate=pl.CostEstimate(flops=int(flops), transcendentals=0,
                                      bytes_accessed=int(bytes_accessed)),
    )(lhs_p, rhs_p, b_p)
    return out[:M, :Cout]


def conv1x1_bn_act(x, w_torch, scale, bias, *, stride, relu):
    """Fused 1x1 conv (stride s, no padding) + BN (+ReLU).  x: NHWC bf16."""
    N, H, W, Cin = x.shape
    Cout, Cin_w, KH, KW = w_torch.shape
    assert (KH, KW) == (1, 1) and Cin_w == Cin
    s = int(stride)
    Ho = (H - 1) // s + 1
    Wo = (W - 1) // s + 1
    rhs = (jnp.transpose(w_torch[:, :, 0, 0], (1, 0)).astype(jnp.float32)
           * scale.astype(jnp.float32))                         # (Cin, Cout)
    xs = x[:, ::s, ::s, :][:, :Ho, :Wo, :].astype(jnp.bfloat16)
    out = matmul_bn_act(xs.reshape(N * Ho * Wo, Cin), rhs, bias, relu)
    return out.reshape(N, Ho, Wo, Cout)


# ---------------------------------------------------------------------------
# BasicBlock forward (eval mode: BatchNorm uses running stats, folded)
# ---------------------------------------------------------------------------
# TODO(synk): train-mode BatchNorm (batch statistics + running-stat update) is
# not implemented; eval-mode folded BN matches the module's inference behaviour.
def basic_block_forward_nhwc(x, p):
    """BasicBlock forward on NHWC bf16 activations (chaining-friendly layout)."""
    s, d = p['stride'], p['dilation']
    out = conv3x3_bn_act(x, p['conv1_w'], p['bn1_scale'], p['bn1_bias'],
                         stride=s, dilation=d, relu=True)
    if p.get('down_w') is not None:
        residual = conv1x1_bn_act(x, p['down_w'], p['down_scale'], p['down_bias'],
                                  stride=s, relu=False)
    else:
        residual = x
    # conv2 + bn2 + residual add + relu fused in a single shifted-window kernel
    out = conv3x3_bn_act(out, p['conv2_w'], p['bn2_scale'], p['bn2_bias'],
                         stride=1, dilation=1, relu=True, residual=residual)
    return out


def basic_block_forward(x_nchw, p):
    # NCHW <-> NHWC + dtype conversion only at the network boundary; chain
    # blocks through basic_block_forward_nhwc to keep bf16 NHWC in between.
    x = jnp.transpose(x_nchw, (0, 2, 3, 1)).astype(jnp.bfloat16)
    y = basic_block_forward_nhwc(x, p)
    return jnp.transpose(y, (0, 3, 1, 2)).astype(jnp.float32)


# ---------------------------------------------------------------------------
# Deterministic synthetic parameters + pure-JAX reference (same bf16 policy)
# ---------------------------------------------------------------------------
def _fold_bn(gamma, beta, mean, var, eps=1e-5):
    scale = gamma / jnp.sqrt(var + eps)
    return scale, beta - mean * scale


def _init_bn(key, c):
    k1, k2, k3, k4 = jax.random.split(key, 4)
    gamma = 1.0 + 0.1 * jax.random.normal(k1, (c,), jnp.float32)
    beta = 0.1 * jax.random.normal(k2, (c,), jnp.float32)
    mean = 0.1 * jax.random.normal(k3, (c,), jnp.float32)
    var = 1.0 + 0.1 * jax.random.uniform(k4, (c,), jnp.float32)
    return _fold_bn(gamma, beta, mean, var)


def make_basic_block_params(key, inplanes, planes, stride=1, dilation=1):
    ks = jax.random.split(key, 6)
    p = {
        'stride': stride, 'dilation': dilation,
        'conv1_w': 0.05 * jax.random.normal(ks[0], (planes, inplanes, 3, 3), jnp.float32),
        'conv2_w': 0.05 * jax.random.normal(ks[1], (planes, planes, 3, 3), jnp.float32),
        'down_w': None,
    }
    p['bn1_scale'], p['bn1_bias'] = _init_bn(ks[2], planes)
    p['bn2_scale'], p['bn2_bias'] = _init_bn(ks[3], planes)
    if stride != 1 or inplanes != planes:
        p['down_w'] = 0.05 * jax.random.normal(ks[4], (planes, inplanes, 1, 1), jnp.float32)
        p['down_scale'], p['down_bias'] = _init_bn(ks[5], planes)
    return p


def _q(a):  # bf16 round-trip, to mirror the kernel's dtype policy
    return a.astype(jnp.bfloat16).astype(jnp.float32)


def basic_block_reference(x_nchw, p):
    x = _q(jnp.transpose(x_nchw, (0, 2, 3, 1)).astype(jnp.float32))
    s, d = p['stride'], p['dilation']

    def conv_bn(h, w_t, scale, bias, stride, dilation, padding, relu, res=None):
        wf = jnp.transpose(w_t, (2, 3, 1, 0)).astype(jnp.float32) * scale
        y = jax.lax.conv_general_dilated(
            _q(h), _q(wf), window_strides=(stride, stride),
            padding=[(padding, padding), (padding, padding)],
            rhs_dilation=(dilation, dilation),
            dimension_numbers=('NHWC', 'HWIO', 'NHWC'),
            precision=jax.lax.Precision.HIGHEST)
        y = y + bias
        if res is not None:
            y = y + _q(res)
        if relu:
            y = jnp.maximum(y, 0.0)
        return _q(y)

    pad1 = (3 + (d - 1) * 2 - 1) // 2
    out = conv_bn(x, p['conv1_w'], p['bn1_scale'], p['bn1_bias'], s, d, pad1, True)
    if p.get('down_w') is not None:
        residual = conv_bn(x, p['down_w'], p['down_scale'], p['down_bias'],
                           s, 1, 0, False)
    else:
        residual = x
    out = conv_bn(out, p['conv2_w'], p['bn2_scale'], p['bn2_bias'],
                  1, 1, 1, True, res=residual)
    return jnp.transpose(out, (0, 3, 1, 2))


# ---------------------------------------------------------------------------
if __name__ == "__main__":
    key = jax.random.PRNGKey(0)
    kx, ka, kb, kc = jax.random.split(key, 4)

    B, C, H, W = 2, 64, 16, 16
    x = jax.random.normal(kx, (B, C, H, W), jnp.float32)

    # Block A: identity residual (64 -> 64, stride 1, dilation 1)
    pa = make_basic_block_params(ka, 64, 64, stride=1, dilation=1)
    ya = basic_block_forward(x, pa)
    jax.block_until_ready(ya)
    ra = basic_block_reference(x, pa)
    assert ya.shape == (B, 64, H, W)
    assert jnp.allclose(ya, ra, atol=8e-2, rtol=5e-2), \
        float(jnp.max(jnp.abs(ya - ra)))

    # Block B: downsampling block (64 -> 128, stride 2, 1x1 downsample)
    pb = make_basic_block_params(kb, 64, 128, stride=2, dilation=1)
    yb = basic_block_forward(x, pb)
    jax.block_until_ready(yb)
    rb = basic_block_reference(x, pb)
    assert yb.shape == (B, 128, H // 2, W // 2)
    assert jnp.allclose(yb, rb, atol=8e-2, rtol=5e-2), \
        float(jnp.max(jnp.abs(yb - rb)))

    # Block C: dilated block (64 -> 64, stride 1, dilation 2)
    pc = make_basic_block_params(kc, 64, 64, stride=1, dilation=2)
    yc = basic_block_forward(x, pc)
    jax.block_until_ready(yc)
    rc = basic_block_reference(x, pc)
    assert yc.shape == (B, 64, H, W)
    assert jnp.allclose(yc, rc, atol=8e-2, rtol=5e-2), \
        float(jnp.max(jnp.abs(yc - rc)))

    print("KERNEL_OK")
</pallas_src>

<mosaic_0001>
module attributes {stable_mosaic.version = 11 : i64} {
  func.func @_conv3x3_kernel(%arg0: i32, %arg1: i32, %arg2: i32, %arg3: memref<1x288x192xbf16, #tpu.memory_space<vmem>>, %arg4: memref<3x192x64xbf16, #tpu.memory_space<vmem>>, %arg5: memref<1x64xf32, #tpu.memory_space<vmem>>, %arg6: memref<256x64xbf16, #tpu.memory_space<vmem>>) attributes {dimension_semantics = [#tpu.dimension_semantics<parallel>, #tpu.dimension_semantics<parallel>, #tpu.dimension_semantics<parallel>], iteration_bounds = array<i64: 2, 1, 1>, scalar_prefetch = 0 : i64, scratch_operands = 0 : i64, tpu.core_type = #tpu.core_type<tc>, window_params = [{transform_indices = @transform_0, window_bounds = array<i64: 1, 288, 192>}, {transform_indices = @transform_1, window_bounds = array<i64: 3, 192, 64>}, {transform_indices = @transform_2, window_bounds = array<i64: 1, 64>}, {transform_indices = @transform_3, window_bounds = array<i64: 256, 64>}]} {
    %c256_i32 = arith.constant 256 : i32
    %0 = arith.muli %arg1, %c256_i32 : i32
    %c0_i32 = arith.constant 0 : i32
    %1 = arith.addi %0, %c0_i32 : i32
    %2 = tpu.assume_multiple %1, 8 : i32
    %c0 = arith.constant 0 : index
    %3 = arith.index_cast %2 : i32 to index
    %c0_0 = arith.constant 0 : index
    %4 = vector.load %arg3[%c0, %3, %c0_0] : memref<1x288x192xbf16, #tpu.memory_space<vmem>>, vector<1x256x192xbf16>
    %5 = vector.shape_cast %4 : vector<1x256x192xbf16> to vector<256x192xbf16>
    %c0_1 = arith.constant 0 : index
    %c0_2 = arith.constant 0 : index
    %c0_3 = arith.constant 0 : index
    %6 = vector.load %arg4[%c0_1, %c0_2, %c0_3] : memref<3x192x64xbf16, #tpu.memory_space<vmem>>, vector<1x192x64xbf16>
    %7 = vector.shape_cast %6 : vector<1x192x64xbf16> to vector<192x64xbf16>
    %cst = arith.constant dense<0.000000e+00> : vector<256x64xf32>
    %8 = tpu.matmul %5, %7, %cst {dimension_numbers = #tpu.dot_dimension_numbers<[1], [0], [0], [1], [0, 0, 1, 1], [], []>} : vector<256x192xbf16>, vector<192x64xbf16>, vector<256x64xf32> -> vector<256x64xf32>
    %c16_i32 = arith.constant 16 : i32
    %9 = arith.addi %0, %c16_i32 : i32
    %10 = tpu.assume_multiple %9, 8 : i32
    %c0_4 = arith.constant 0 : index
    %11 = arith.index_cast %10 : i32 to index
    %c0_5 = arith.constant 0 : index
    %12 = vector.load %arg3[%c0_4, %11, %c0_5] : memref<1x288x192xbf16, #tpu.memory_space<vmem>>, vector<1x256x192xbf16>
    %13 = vector.shape_cast %12 : vector<1x256x192xbf16> to vector<256x192xbf16>
    %c1 = arith.constant 1 : index
    %c0_6 = arith.constant 0 : index
    %c0_7 = arith.constant 0 : index
    %14 = vector.load %arg4[%c1, %c0_6, %c0_7] : memref<3x192x64xbf16, #tpu.memory_space<vmem>>, vector<1x192x64xbf16>
    %15 = vector.shape_cast %14 : vector<1x192x64xbf16> to vector<192x64xbf16>
    %cst_8 = arith.constant dense<0.000000e+00> : vector<256x64xf32>
    %16 = tpu.matmul %13, %15, %cst_8 {dimension_numbers = #tpu.dot_dimension_numbers<[1], [0], [0], [1], [0, 0, 1, 1], [], []>} : vector<256x192xbf16>, vector<192x64xbf16>, vector<256x64xf32> -> vector<256x64xf32>
    %17 = arith.addf %8, %16 : vector<256x64xf32>
    %c32_i32 = arith.constant 32 : i32
    %18 = arith.addi %0, %c32_i32 : i32
    %19 = tpu.assume_multiple %18, 8 : i32
    %c0_9 = arith.constant 0 : index
    %20 = arith.index_cast %19 : i32 to index
    %c0_10 = arith.constant 0 : index
    %21 = vector.load %arg3[%c0_9, %20, %c0_10] : memref<1x288x192xbf16, #tpu.memory_space<vmem>>, vector<1x256x192xbf16>
    %22 = vector.shape_cast %21 : vector<1x256x192xbf16> to vector<256x192xbf16>
    %c2 = arith.constant 2 : index
    %c0_11 = arith.constant 0 : index
    %c0_12 = arith.constant 0 : index
    %23 = vector.load %arg4[%c2, %c0_11, %c0_12] : memref<3x192x64xbf16, #tpu.memory_space<vmem>>, vector<1x192x64xbf16>
    %24 = vector.shape_cast %23 : vector<1x192x64xbf16> to vector<192x64xbf16>
    %cst_13 = arith.constant dense<0.000000e+00> : vector<256x64xf32>
    %25 = tpu.matmul %22, %24, %cst_13 {dimension_numbers = #tpu.dot_dimension_numbers<[1], [0], [0], [1], [0, 0, 1, 1], [], []>} : vector<256x192xbf16>, vector<192x64xbf16>, vector<256x64xf32> -> vector<256x64xf32>
    %26 = arith.addf %17, %25 : vector<256x64xf32>
    %c0_14 = arith.constant 0 : index
    %c0_15 = arith.constant 0 : index
    %27 = vector.load %arg5[%c0_14, %c0_15] : memref<1x64xf32, #tpu.memory_space<vmem>>, vector<1x64xf32>
    %28 = vector.broadcast %27 : vector<1x64xf32> to vector<256x64xf32>
    %29 = arith.addf %26, %28 : vector<256x64xf32>
    %cst_16 = arith.constant 0.000000e+00 : f32
    %30 = vector.broadcast %cst_16 : f32 to vector<256x64xf32>
    %31 = arith.maximumf %29, %30 : vector<256x64xf32>
    %32 = arith.truncf %31 : vector<256x64xf32> to vector<256x64xbf16>
    %c0_17 = arith.constant 0 : index
    %c0_18 = arith.constant 0 : index
    %33 = vector.load %arg6[%c0_17, %c0_18] : memref<256x64xbf16, #tpu.memory_space<vmem>>, vector<256x64xbf16>
    tpu.vector_store %arg6[%c0_17, %c0_18], %32 {strides = array<i32>} : memref<256x64xbf16, #tpu.memory_space<vmem>>, vector<256x64xbf16>,
    return
  }
  func.func @transform_0(%arg0: i32, %arg1: i32, %arg2: i32) -> (i32, i32, i32) {
    %c0_i32 = arith.constant 0 : i32
    %c0_i32_0 = arith.constant 0 : i32
    %c0_i32_1 = arith.constant 0 : i32
    return %c0_i32, %arg0, %c0_i32_0 : i32, i32, i32
  }
  func.func @transform_1(%arg0: i32, %arg1: i32, %arg2: i32) -> (i32, i32, i32) {
    %c0_i32 = arith.constant 0 : i32
    %c0_i32_0 = arith.constant 0 : i32
    %c0_i32_1 = arith.constant 0 : i32
    return %c0_i32, %c0_i32_0, %arg2 : i32, i32, i32
  }
  func.func @transform_2(%arg0: i32, %arg1: i32, %arg2: i32) -> (i32, i32) {
    %c0_i32 = arith.constant 0 : i32
    %c0_i32_0 = arith.constant 0 : i32
    return %c0_i32, %arg2 : i32, i32
  }
  func.func @transform_3(%arg0: i32, %arg1: i32, %arg2: i32) -> (i32, i32) {
    %c1_i32 = arith.constant 1 : i32
    %0 = arith.muli %arg0, %c1_i32 : i32
    %1 = arith.addi %0, %arg1 : i32
    %c0_i32 = arith.constant 0 : i32
    return %1, %arg2 : i32, i32
  }
}

</mosaic_0001>

<llo_original>
// kernel: tpu_custom_call.1
$region0: #{tpu_custom_call.1}
  #allocation0 [shape = 'u32[]', space=smem, size = 0x4, offset = 0x4, fixed_abs, tag = 'smem constant byte address 0x4 - core index']
  #allocation1 [shape = 'u32[144,128]{1,0:T(1,128)}', space=vmem, size = 0x12000, scoped, tag = 'internal scratch']
  %s0 = inlined_call_operand.hbm [shape: bf16[1,576,192], index: 0, kind: input, shape index: {}]
  %s1 = inlined_call_operand.hbm [shape: bf16[3,192,64], index: 1, kind: input, shape index: {}]
  %s2 = inlined_call_operand.hbm [shape: f32[1,64], index: 2, kind: input, shape index: {}]
  %s3 = inlined_call_operand.hbm [shape: bf16[512,64], index: 3, kind: output, shape index: {}]
  %s4 = sld [smem:[#allocation0]]
  $region57: #{tpu_custom_call.1} parent=0
    _
  %s6 = ssub.s32 1, %s4
  %s7 = scalar_select 0, %s6, %s4
  $region1: #{tpu_custom_call.1} parent=0
    #allocation2 [shape = 'u8[294912]{0}', space=vmem, size = 0x48000, scoped, tag = 'input window, operand 0']
    #allocation3 [shape = 's32[2]{0}', space=sflag, size = 0x8, scoped, tag = 'scoped memory for tpu_custom_call.1']
    #allocation4 [shape = 's32[2]{0}', space=sflag, size = 0x8, scoped, tag = 'scoped memory for tpu_custom_call.1']
    #allocation5 [shape = 'u8[147456]{0}', space=vmem, size = 0x24000, scoped, tag = 'input window, operand 1, single buffered']
    #allocation6 [shape = 's32[1]{0}', space=sflag, size = 0x4, scoped, tag = 'scoped memory for tpu_custom_call.1']
    #allocation7 [shape = 'u8[512]{0}', space=vmem, size = 0x400, scoped, tag = 'input window, operand 2, single buffered']
    #allocation8 [shape = 'u8[131072]{0}', space=vmem, size = 0x20000, scoped, tag = 'output window, operand 0']
    %8 = vsyncpa [#allocation3], 0
    %s9 = scalar_lea.sflag [#allocation3], 1
    %10 = vsyncpa %s9, 0
    %11 = vsyncpa [#allocation6], 0
    %12 = vsyncpa [#allocation4], 0
    %s13 = scalar_lea.sflag [#allocation4], 1
    %14 = vsyncpa %s13, 0
    loop: start=0, step=1, limit=4
    $region2: #{tpu_custom_call.1} parent=1 // loop_pre_header
      _
    $region3: #{tpu_custom_call.1} parent=1 // loop_header
      %s16 = sphi 0, %s20
      %p17 = scmp.ge.s32.totalorder %s16, 4
      %s23 = sphi 0, %s42
      %s24 = sphi 0, %s38
      %s25 = sphi 0, %s34
      %s26 = sphi 0, %s23
      %s27 = sphi 0, %s24
      %s28 = sphi 0, %s25
      %s29 = sphi 0, %s26
      %s30 = sphi 0, %s27
      %s31 = sphi 0, %s28
      %s45 = sphi 0, %s47
      %s48 = sphi 0, %s45
      %s49 = sphi 0, %s48
      %s65 = sphi 0, %s49
      %s71 = sphi 0, %s73
      %s74 = sphi 0, %s71
      %s75 = sphi 0, %s74
      %s91 = sphi 0, %s75
      %s97 = sphi 0, %s99
      %s100 = sphi 0, %s97
      %s101 = sphi 0, %s100
      %s117 = sphi 0, %s101
      %s127 = sphi 0, %s129
      %s130 = sphi 0, %s127
      %s131 = sphi 0, %s130
      %s147 = sphi 0, %s131
    $region4: #{tpu_custom_call.1} parent=1 // loop_header_branch
      %19 = sbr.rel (%p17) target = $region8
    $region5: #{tpu_custom_call.1} parent=1 // loop_body
      %s21 = ssub.s32 %s16, 1
      %s22 = ssub.s32 %s16, 2
      %s32 = sadd.s32 1, %s25
      %p33 = scmp.ge.s32.totalorder %s32, 1
      %s34 = scalar_select %p33, 0, %s32
      %s35 = sadd.s32 1, %s24
      %s36 = scalar_select %p33, %s35, %s24
      %p37 = scmp.ge.s32.totalorder %s36, 1
      %s38 = scalar_select %p37, 0, %s36
      %s39 = sadd.s32 1, %s23
      %s40 = scalar_select %p37, %s39, %s23
      %p41 = scmp.ge.s32.totalorder %s40, 2
      %s42 = scalar_select %p41, 0, %s40
      %s43 = ssub.s32 %s23, %s42
      %p44 = scmp.eq.s32.totalorder %s43, 0
      %s46 = sadd.s32 %s45, 1
      %s47 = scalar_select %p44, %s45, %s46
      %p50 = pneg %p44
      %p51 = scmp.eq.s32.totalorder %s16, 1
      %p52 = por %p50, %p51
      %p53 = scmp.ne.s32.totalorder %s45, %s48
      %p54 = scmp.eq.s32.totalorder %s16, 0
      %p55 = por %p53, %p54
      %p56 = scmp.ne.s32.totalorder %s45, %s48
      %p57 = scmp.eq.s32.totalorder %s21, 1
      %p58 = por %p56, %p57
      %p59 = scmp.ne.s32.totalorder %s48, %s49
      %p60 = scmp.eq.s32.totalorder %s21, 0
      %p61 = por %p59, %p60
      %p62 = scmp.ne.s32.totalorder %s48, %s49
      %p63 = scmp.eq.s32.totalorder %s22, 1
      %p64 = por %p62, %p63
      %p66 = scmp.ne.s32.totalorder %s49, %s65
      %p67 = scmp.eq.s32.totalorder %s22, 0
      %p68 = por %p66, %p67
      %s69 = ssub.s32 %s25, %s34
      %p70 = scmp.eq.s32.totalorder %s69, 0
      %s72 = sadd.s32 %s71, 1
      %s73 = scalar_select %p70, %s71, %s72
      %p76 = pneg %p70
      %p77 = scmp.eq.s32.totalorder %s16, 1
      %p78 = por %p76, %p77
      %p79 = scmp.ne.s32.totalorder %s71, %s74
      %p80 = scmp.eq.s32.totalorder %s16, 0
      %p81 = por %p79, %p80
      %p82 = scmp.ne.s32.totalorder %s71, %s74
      %p83 = scmp.eq.s32.totalorder %s21, 1
      %p84 = por %p82, %p83
      %p85 = scmp.ne.s32.totalorder %s74, %s75
      %p86 = scmp.eq.s32.totalorder %s21, 0
      %p87 = por %p85, %p86
      %p88 = scmp.ne.s32.totalorder %s74, %s75
      %p89 = scmp.eq.s32.totalorder %s22, 1
      %p90 = por %p88, %p89
      %p92 = scmp.ne.s32.totalorder %s75, %s91
      %p93 = scmp.eq.s32.totalorder %s22, 0
      %p94 = por %p92, %p93
      %s95 = ssub.s32 %s25, %s34
      %p96 = scmp.eq.s32.totalorder %s95, 0
      %s98 = sadd.s32 %s97, 1
      %s99 = scalar_select %p96, %s97, %s98
      %p102 = pneg %p96
      %p103 = scmp.eq.s32.totalorder %s16, 1
      %p104 = por %p102, %p103
      %p105 = scmp.ne.s32.totalorder %s97, %s100
      %p106 = scmp.eq.s32.totalorder %s16, 0
      %p107 = por %p105, %p106
      %p108 = scmp.ne.s32.totalorder %s97, %s100
      %p109 = scmp.eq.s32.totalorder %s21, 1
      %p110 = por %p108, %p109
      %p111 = scmp.ne.s32.totalorder %s100, %s101
      %p112 = scmp.eq.s32.totalorder %s21, 0
      %p113 = por %p111, %p112
      %p114 = scmp.ne.s32.totalorder %s100, %s101
      %p115 = scmp.eq.s32.totalorder %s22, 1
      %p116 = por %p114, %p115
      %p118 = scmp.ne.s32.totalorder %s101, %s117
      %p119 = scmp.eq.s32.totalorder %s22, 0
      %p120 = por %p118, %p119
      %s121 = sadd.s32 %s23, %s24
      %s122 = sadd.s32 %s42, %s38
      %s123 = ssub.s32 %s121, %s122
      %s124 = ssub.s32 %s25, %s34
      %s125 = sor.u32 %s123, %s124
      %p126 = scmp.eq.s32.totalorder %s125, 0
      %s128 = sadd.s32 %s127, 1
      %s129 = scalar_select %p126, %s127, %s128
      %p132 = pneg %p126
      %p133 = scmp.eq.s32.totalorder %s16, 1
      %p134 = por %p132, %p133
      %p135 = scmp.ne.s32.totalorder %s127, %s130
      %p136 = scmp.eq.s32.totalorder %s16, 0
      %p137 = por %p135, %p136
      %p138 = scmp.ne.s32.totalorder %s127, %s130
      %p139 = scmp.eq.s32.totalorder %s21, 1
      %p140 = por %p138, %p139
      %p141 = scmp.ne.s32.totalorder %s130, %s131
      %p142 = scmp.eq.s32.totalorder %s21, 0
      %p143 = por %p141, %p142
      %p144 = scmp.ne.s32.totalorder %s130, %s131
      %p145 = scmp.eq.s32.totalorder %s22, 1
      %p146 = por %p144, %p145
      %p148 = scmp.ne.s32.totalorder %s131, %s147
      %p149 = scmp.eq.s32.totalorder %s22, 0
      %p150 = por %p148, %p149
      %p151 = scmp.le.s32.totalorder 1, %s16
      %p152 = scmp.lt.s32.totalorder %s16, 3
      %p153 = pnand %p151, %p152
      %p154 = pneg %p153
      // Predicated region
      $region9: #{tpu_custom_call.1} parent=5 // pred_check
        _
      $region10: #{tpu_custom_call.1} parent=5 // pred_check_branch
        %156 = sbr.rel (%p153) target = $region12
      $region11: #{tpu_custom_call.1} parent=5 // pred_region
        %s157 = ssub.s32 %s16, 1
        // Predicated region
        $region13: #{tpu_custom_call.1} parent=11 // pred_check
          %p158 = pneg %p87
        $region14: #{tpu_custom_call.1} parent=11 // pred_check_branch
          %160 = sbr.rel (%p158) target = $region16
        $region15: #{tpu_custom_call.1} parent=11 // pred_region
          %s162 = ssub.s32 4608, 4608
          %163 = vsyncadd [#allocation6], %s162
          %s164 = smul.addr %s28, 64
          %s165 = scalar_lea.hbm %s1, %s164
          %s166 = sshll.u32 [#allocation5], 4
          %s167 = int_to_ptr.vmem [resolvable:$true] %s166
          %172 = dma.hbm_to_vmem [thread:$0]  %s165, 4608, %s167, [#allocation6], 64, 64, 4
        $region16: #{tpu_custom_call.1} parent=11 // pred_fallthru
          _
        // Predicated region
        $region17: #{tpu_custom_call.1} parent=11 // pred_check
          %p173 = pneg %p113
        $region18: #{tpu_custom_call.1} parent=11 // pred_check_branch
          %175 = sbr.rel (%p173) target = $region20
        $region19: #{tpu_custom_call.1} parent=11 // pred_region
          %s177 = ssub.s32 16, 16
          %178 = vsyncadd [#allocation6], %s177
          %s179 = smul.addr %s28, 16
          %s180 = scalar_lea.hbm %s2, %s179
          %s182 = sshll.u32 [#allocation7], 4
          %s183 = int_to_ptr.vmem [resolvable:$true] %s182
          %185 = dma.hbm_to_vmem [thread:$0]  %s180, 16, %s183, [#allocation6]
        $region20: #{tpu_custom_call.1} parent=11 // pred_fallthru
          _
      $region12: #{tpu_custom_call.1} parent=5 // pred_fallthru
        _
      %p186 = scmp.lt.s32.totalorder %s16, 2
      // Predicated region
      $region21: #{tpu_custom_call.1} parent=5 // pred_check
        %p187 = pneg %p186
      $region22: #{tpu_custom_call.1} parent=5 // pred_check_branch
        %189 = sbr.rel (%p187) target = $region24
      $region23: #{tpu_custom_call.1} parent=5 // pred_region
        // Predicated region
        $region25: #{tpu_custom_call.1} parent=23 // pred_check
          %p190 = pneg %p55
        $region26: #{tpu_custom_call.1} parent=23 // pred_check_branch
          %192 = sbr.rel (%p190) target = $region28
        $region27: #{tpu_custom_call.1} parent=23 // pred_region
          %s193 = sand.u32 %s45, 1
          %s194 = scalar_lea.sflag [#allocation3], %s193
          %s195 = sand.u32 %s45, 1
          %s196 = smul.addr %s195, 288
          %s197 = scalar_lea.vmem [#allocation2], %s196
          %s198 = smul.u32 36, %s23
          %s200 = ssub.s32 4608, 4608
          %201 = vsyncadd %s194, %s200
          %s202 = smul.addr %s198, 2
          %s203 = smul.addr %s202, 64
          %s204 = scalar_lea.hbm %s0, %s203
          %s205 = sshll.u32 %s197, 4
          %s206 = int_to_ptr.vmem [resolvable:$true] %s205
          %211 = dma.hbm_to_vmem [thread:$0]  %s204, 4608, %s206, %s194, 128, 128, 8
        $region28: #{tpu_custom_call.1} parent=23 // pred_fallthru
          _
      $region24: #{tpu_custom_call.1} parent=5 // pred_fallthru
        _
      %p212 = scmp.le.s32.totalorder 1, %s16
      %p213 = scmp.lt.s32.totalorder %s16, 3
      %p214 = pnand %p212, %p213
      %p215 = pneg %p214
      // Predicated region
      $region29: #{tpu_custom_call.1} parent=5 // pred_check
        _
      $region30: #{tpu_custom_call.1} parent=5 // pred_check_branch
        %217 = sbr.rel (%p214) target = $region32
      $region31: #{tpu_custom_call.1} parent=5 // pred_region
        %s218 = ssub.s32 %s16, 1
        %s219 = sand.u32 %s48, 1
        %s220 = scalar_lea.sflag [#allocation3], %s219
        %s221 = sand.u32 %s48, 1
        %s222 = smul.addr %s221, 288
        %s223 = scalar_lea.vmem [#allocation2], %s222
        // Predicated region
        $region33: #{tpu_custom_call.1} parent=31 // pred_check
          %p224 = pneg %p61
        $region34: #{tpu_custom_call.1} parent=31 // pred_check_branch
          %226 = sbr.rel (%p224) target = $region36
        $region35: #{tpu_custom_call.1} parent=31 // pred_region
          %227 = dma.done %s220, 4608
        $region36: #{tpu_custom_call.1} parent=31 // pred_fallthru
          _
        // Predicated region
        $region37: #{tpu_custom_call.1} parent=31 // pred_check
          %p228 = pneg %p87
        $region38: #{tpu_custom_call.1} parent=31 // pred_check_branch
          %230 = sbr.rel (%p228) target = $region40
        $region39: #{tpu_custom_call.1} parent=31 // pred_region
          %231 = dma.done [#allocation6], 4608
        $region40: #{tpu_custom_call.1} parent=31 // pred_fallthru
          _
        // Predicated region
        $region41: #{tpu_custom_call.1} parent=31 // pred_check
          %p232 = pneg %p113
        $region42: #{tpu_custom_call.1} parent=31 // pred_check_branch
          %234 = sbr.rel (%p232) target = $region44
        $region43: #{tpu_custom_call.1} parent=31 // pred_region
          %235 = dma.done [#allocation6], 16
        $region44: #{tpu_custom_call.1} parent=31 // pred_fallthru
          _
        %s236 = sand.u32 %s48, 1
        %s237 = scalar_lea.sflag [#allocation3], %s236
        %s238 = sand.u32 %s48, 1
        %s239 = smul.addr %s238, 288
        %s240 = scalar_lea.vmem [#allocation2], %s239
        %p241 = pneg %p61
        %p242 = pneg %p58
        %p243 = pneg %p87
        %p244 = pneg %p84
        %p245 = pneg %p113
        %p246 = pneg %p110
        %p247 = pneg %p143
        %p248 = pneg %p140
        %s249 = sand.u32 %s130, 1
        %s250 = scalar_lea.sflag [#allocation4], %s249
        %s251 = sand.u32 %s130, 1
        %s252 = smul.addr %s251, 128
        %s253 = scalar_lea.vmem [#allocation8], %s252
        %s254 = smul.u32 36, %s26
        %s255 = sadd.s32 %s26, %s27
        %s256 = smul.u32 32, %s255
        %s258 = smul.u32 %s27, 256
        %s259 = sshra.s32 %s258, 3
        %s260 = sand.u32 %s258, 7
        %s261 = smul.u32 %s259, 2
        %s262 = smul.addr %s261, 4
        %s263 = scalar_lea.vmem %s223, %s262 [#allocation2]
        %v264 = vld [vmem:[%s263] sm:$0xff]
        %v265 = vld [vmem:[%s263 + $0x8] sm:$0xff]
        %v266 = vld [vmem:[%s263 + $0x10] sm:$0xff]
        %v267 = vld [vmem:[%s263 + $0x18] sm:$0xff]
        %v268 = vld [vmem:[%s263 + $0x20] sm:$0xff]
        %v269 = vld [vmem:[%s263 + $0x28] sm:$0xff]
        %v270 = vld [vmem:[%s263 + $0x30] sm:$0xff]
        %v271 = vld [vmem:[%s263 + $0x38] sm:$0xff]
        %v272 = vld [vmem:[%s263 + $0x40] sm:$0xff]
        %v273 = vld [vmem:[%s263 + $0x48] sm:$0xff]
        %v274 = vld [vmem:[%s263 + $0x50] sm:$0xff]
        %v275 = vld [vmem:[%s263 + $0x58] sm:$0xff]
        %v276 = vld [vmem:[%s263 + $0x60] sm:$0xff]
        %v277 = vld [vmem:[%s263 + $0x68] sm:$0xff]
        %v278 = vld [vmem:[%s263 + $0x70] sm:$0xff]
        %v279 = vld [vmem:[%s263 + $0x78] sm:$0xff]
        %v280 = vld [vmem:[%s263 + $0x80] sm:$0xff]
        %v281 = vld [vmem:[%s263 + $0x88] sm:$0xff]
        %v282 = vld [vmem:[%s263 + $0x90] sm:$0xff]
        %v283 = vld [vmem:[%s263 + $0x98] sm:$0xff]
        %v284 = vld [vmem:[%s263 + $0xa0] sm:$0xff]
        %v285 = vld [vmem:[%s263 + $0xa8] sm:$0xff]
        %v286 = vld [vmem:[%s263 + $0xb0] sm:$0xff]
        %v287 = vld [vmem:[%s263 + $0xb8] sm:$0xff]
        %v288 = vld [vmem:[%s263 + $0xc0] sm:$0xff]
        %v289 = vld [vmem:[%s263 + $0xc8] sm:$0xff]
        %v290 = vld [vmem:[%s263 + $0xd0] sm:$0xff]
        %v291 = vld [vmem:[%s263 + $0xd8] sm:$0xff]
        %v292 = vld [vmem:[%s263 + $0xe0] sm:$0xff]
        %v293 = vld [vmem:[%s263 + $0xe8] sm:$0xff]
        %v294 = vld [vmem:[%s263 + $0xf0] sm:$0xff]
        %v295 = vld [vmem:[%s263 + $0xf8] sm:$0xff]
        %v296 = vld [vmem:[#allocation5] sm:$0xf]
        %v297 = vld [vmem:[#allocation5 + $0x4] sm:$0xf]
        %v298 = vld [vmem:[#allocation5 + $0x8] sm:$0xf]
        %v299 = vld [vmem:[#allocation5 + $0xc] sm:$0xf]
        %v300 = vld [vmem:[#allocation5 + $0x10] sm:$0xf]
        %v301 = vld [vmem:[#allocation5 + $0x14] sm:$0xf]
        %v302 = vld [vmem:[#allocation5 + $0x18] sm:$0xf]
        %v303 = vld [vmem:[#allocation5 + $0x1c] sm:$0xf]
        %v304 = vld [vmem:[#allocation5 + $0x20] sm:$0xf]
        %v305 = vld [vmem:[#allocation5 + $0x24] sm:$0xf]
        %v306 = vld [vmem:[#allocation5 + $0x28] sm:$0xf]
        %v307 = vld [vmem:[#allocation5 + $0x2c] sm:$0xf]
        %v308 = vld [vmem:[#allocation5 + $0x30] sm:$0xf]
        %v309 = vld [vmem:[#allocation5 + $0x34] sm:$0xf]
        %v310 = vld [vmem:[#allocation5 + $0x38] sm:$0xf]
        %v311 = vld [vmem:[#allocation5 + $0x3c] sm:$0xf]
        %v312 = vld [vmem:[#allocation5 + $0x40] sm:$0xf]
        %v313 = vld [vmem:[#allocation5 + $0x44] sm:$0xf]
        %v314 = vld [vmem:[#allocation5 + $0x48] sm:$0xf]
        %v315 = vld [vmem:[#allocation5 + $0x4c] sm:$0xf]
        %v316 = vld [vmem:[#allocation5 + $0x50] sm:$0xf]
        %v317 = vld [vmem:[#allocation5 + $0x54] sm:$0xf]
        %v318 = vld [vmem:[#allocation5 + $0x58] sm:$0xf]
        %v319 = vld [vmem:[#allocation5 + $0x5c] sm:$0xf]
        %s320 = sadd.s32 %s258, 16
        %s321 = sshra.s32 %s320, 3
        %s322 = sand.u32 %s320, 7
        %s323 = smul.u32 %s321, 2
        %s324 = smul.addr %s323, 4
        %s325 = scalar_lea.vmem %s223, %s324 [#allocation2]
        %v326 = vld [vmem:[%s325] sm:$0xff]
        %v327 = vld [vmem:[%s325 + $0x8] sm:$0xff]
        %v328 = vld [vmem:[%s325 + $0x10] sm:$0xff]
        %v329 = vld [vmem:[%s325 + $0x18] sm:$0xff]
        %v330 = vld [vmem:[%s325 + $0x20] sm:$0xff]
        %v331 = vld [vmem:[%s325 + $0x28] sm:$0xff]
        %v332 = vld [vmem:[%s325 + $0x30] sm:$0xff]
        %v333 = vld [vmem:[%s325 + $0x38] sm:$0xff]
        %v334 = vld [vmem:[%s325 + $0x40] sm:$0xff]
        %v335 = vld [vmem:[%s325 + $0x48] sm:$0xff]
        %v336 = vld [vmem:[%s325 + $0x50] sm:$0xff]
        %v337 = vld [vmem:[%s325 + $0x58] sm:$0xff]
        %v338 = vld [vmem:[%s325 + $0x60] sm:$0xff]
        %v339 = vld [vmem:[%s325 + $0x68] sm:$0xff]
        %v340 = vld [vmem:[%s325 + $0x70] sm:$0xff]
        %v341 = vld [vmem:[%s325 + $0x78] sm:$0xff]
        %v342 = vld [vmem:[%s325 + $0x80] sm:$0xff]
        %v343 = vld [vmem:[%s325 + $0x88] sm:$0xff]
        %v344 = vld [vmem:[%s325 + $0x90] sm:$0xff]
        %v345 = vld [vmem:[%s325 + $0x98] sm:$0xff]
        %v346 = vld [vmem:[%s325 + $0xa0] sm:$0xff]
        %v347 = vld [vmem:[%s325 + $0xa8] sm:$0xff]
        %v348 = vld [vmem:[%s325 + $0xb0] sm:$0xff]
        %v349 = vld [vmem:[%s325 + $0xb8] sm:$0xff]
        %v350 = vld [vmem:[%s325 + $0xc0] sm:$0xff]
        %v351 = vld [vmem:[%s325 + $0xc8] sm:$0xff]
        %v352 = vld [vmem:[%s325 + $0xd0] sm:$0xff]
        %v353 = vld [vmem:[%s325 + $0xd8] sm:$0xff]
        %v354 = vld [vmem:[%s325 + $0xe0] sm:$0xff]
        %v355 = vld [vmem:[%s325 + $0xe8] sm:$0xff]
        %v356 = vld [vmem:[%s325 + $0xf0] sm:$0xff]
        %v357 = vld [vmem:[%s325 + $0xf8] sm:$0xff]
        %s358 = scalar_lea.vmem [#allocation5], 96
        %v359 = vld [vmem:[%s358] sm:$0xf]
        %v360 = vld [vmem:[%s358 + $0x4] sm:$0xf]
        %v361 = vld [vmem:[%s358 + $0x8] sm:$0xf]
        %v362 = vld [vmem:[%s358 + $0xc] sm:$0xf]
        %v363 = vld [vmem:[%s358 + $0x10] sm:$0xf]
        %v364 = vld [vmem:[%s358 + $0x14] sm:$0xf]
        %v365 = vld [vmem:[%s358 + $0x18] sm:$0xf]
        %v366 = vld [vmem:[%s358 + $0x1c] sm:$0xf]
        %v367 = vld [vmem:[%s358 + $0x20] sm:$0xf]
        %v368 = vld [vmem:[%s358 + $0x24] sm:$0xf]
        %v369 = vld [vmem:[%s358 + $0x28] sm:$0xf]
        %v370 = vld [vmem:[%s358 + $0x2c] sm:$0xf]
        %v371 = vld [vmem:[%s358 + $0x30] sm:$0xf]
        %v372 = vld [vmem:[%s358 + $0x34] sm:$0xf]
        %v373 = vld [vmem:[%s358 + $0x38] sm:$0xf]
        %v374 = vld [vmem:[%s358 + $0x3c] sm:$0xf]
        %v375 = vld [vmem:[%s358 + $0x40] sm:$0xf]
        %v376 = vld [vmem:[%s358 + $0x44] sm:$0xf]
        %v377 = vld [vmem:[%s358 + $0x48] sm:$0xf]
        %v378 = vld [vmem:[%s358 + $0x4c] sm:$0xf]
        %v379 = vld [vmem:[%s358 + $0x50] sm:$0xf]
        %v380 = vld [vmem:[%s358 + $0x54] sm:$0xf]
        %v381 = vld [vmem:[%s358 + $0x58] sm:$0xf]
        %v382 = vld [vmem:[%s358 + $0x5c] sm:$0xf]
        %v415 = vunpack.c.l.b16 %v326
        %v416 = vunpack.c.h.b16 %v326
        %v417 = vunpack.c.l.b16 %v327
        %v418 = vunpack.c.h.b16 %v327
        %v419 = vunpack.c.l.b16 %v328
        %v420 = vunpack.c.h.b16 %v328
        %v421 = vunpack.c.l.b16 %v329
        %v422 = vunpack.c.h.b16 %v329
        %v423 = vunpack.c.l.b16 %v330
        %v424 = vunpack.c.h.b16 %v330
        %v425 = vunpack.c.l.b16 %v331
        %v426 = vunpack.c.h.b16 %v331
        %v427 = vunpack.c.l.b16 %v332
        %v428 = vunpack.c.h.b16 %v332
        %v429 = vunpack.c.l.b16 %v333
        %v430 = vunpack.c.h.b16 %v333
        %v431 = vunpack.c.l.b16 %v334
        %v432 = vunpack.c.h.b16 %v334
        %v433 = vunpack.c.l.b16 %v335
        %v434 = vunpack.c.h.b16 %v335
        %v435 = vunpack.c.l.b16 %v336
        %v436 = vunpack.c.h.b16 %v336
        %v437 = vunpack.c.l.b16 %v337
        %v438 = vunpack.c.h.b16 %v337
        %v439 = vunpack.c.l.b16 %v338
        %v440 = vunpack.c.h.b16 %v338
        %v441 = vunpack.c.l.b16 %v339
        %v442 = vunpack.c.h.b16 %v339
        %v443 = vunpack.c.l.b16 %v340
        %v444 = vunpack.c.h.b16 %v340
        %v445 = vunpack.c.l.b16 %v341
        %v446 = vunpack.c.h.b16 %v341
        %v447 = vunpack.c.l.b16 %v342
        %v448 = vunpack.c.h.b16 %v342
        %v449 = vunpack.c.l.b16 %v343
        %v450 = vunpack.c.h.b16 %v343
        %v451 = vunpack.c.l.b16 %v344
        %v452 = vunpack.c.h.b16 %v344
        %v453 = vunpack.c.l.b16 %v345
        %v454 = vunpack.c.h.b16 %v345
        %v455 = vunpack.c.l.b16 %v346
        %v456 = vunpack.c.h.b16 %v346
        %v457 = vunpack.c.l.b16 %v347
        %v458 = vunpack.c.h.b16 %v347
        %v459 = vunpack.c.l.b16 %v348
        %v460 = vunpack.c.h.b16 %v348
        %v461 = vunpack.c.l.b16 %v349
        %v462 = vunpack.c.h.b16 %v349
        %v463 = vunpack.c.l.b16 %v350
        %v464 = vunpack.c.h.b16 %v350
        %v465 = vunpack.c.l.b16 %v351
        %v466 = vunpack.c.h.b16 %v351
        %v467 = vunpack.c.l.b16 %v352
        %v468 = vunpack.c.h.b16 %v352
        %v469 = vunpack.c.l.b16 %v353
        %v470 = vunpack.c.h.b16 %v353
        %v471 = vunpack.c.l.b16 %v354
        %v472 = vunpack.c.h.b16 %v354
        %v473 = vunpack.c.l.b16 %v355
        %v474 = vunpack.c.h.b16 %v355
        %v475 = vunpack.c.l.b16 %v356
        %v476 = vunpack.c.h.b16 %v356
        %v477 = vunpack.c.l.b16 %v357
        %v478 = vunpack.c.h.b16 %v357
        %v479 = vpack.c.b16 %v417, %v415
        %v480 = vpack.c.b16 %v418, %v416
        %v481 = vpack.c.b16 %v421, %v419
        %v482 = vpack.c.b16 %v422, %v420
        %v483 = vpack.c.b16 %v425, %v423
        %v484 = vpack.c.b16 %v426, %v424
        %v485 = vpack.c.b16 %v429, %v427
        %v486 = vpack.c.b16 %v430, %v428
        %v487 = vpack.c.b16 %v433, %v431
        %v488 = vpack.c.b16 %v434, %v432
        %v489 = vpack.c.b16 %v437, %v435
        %v490 = vpack.c.b16 %v438, %v436
        %v491 = vpack.c.b16 %v441, %v439
        %v492 = vpack.c.b16 %v442, %v440
        %v493 = vpack.c.b16 %v445, %v443
        %v494 = vpack.c.b16 %v446, %v444
        %v495 = vpack.c.b16 %v449, %v447
        %v496 = vpack.c.b16 %v450, %v448
        %v497 = vpack.c.b16 %v453, %v451
        %v498 = vpack.c.b16 %v454, %v452
        %v499 = vpack.c.b16 %v457, %v455
        %v500 = vpack.c.b16 %v458, %v456
        %v501 = vpack.c.b16 %v461, %v459
        %v502 = vpack.c.b16 %v462, %v460
        %v503 = vpack.c.b16 %v465, %v463
        %v504 = vpack.c.b16 %v466, %v464
        %v505 = vpack.c.b16 %v469, %v467
        %v506 = vpack.c.b16 %v470, %v468
        %v507 = vpack.c.b16 %v473, %v471
        %v508 = vpack.c.b16 %v474, %v472
        %v509 = vpack.c.b16 %v477, %v475
        %v510 = vpack.c.b16 %v478, %v476
        %v551 = vunpack.c.l.b16 %v359
        %v552 = vunpack.c.l.b16 %v360
        %v553 = vunpack.c.l.b16 %v361
        %v554 = vunpack.c.l.b16 %v362
        %v555 = vunpack.c.l.b16 %v363
        %v556 = vunpack.c.l.b16 %v364
        %v557 = vunpack.c.l.b16 %v365
        %v558 = vunpack.c.l.b16 %v366
        %v559 = vunpack.c.l.b16 %v367
        %v560 = vunpack.c.l.b16 %v368
        %v561 = vunpack.c.l.b16 %v369
        %v562 = vunpack.c.l.b16 %v370
        %v563 = vunpack.c.l.b16 %v371
        %v564 = vunpack.c.l.b16 %v372
        %v565 = vunpack.c.l.b16 %v373
        %v566 = vunpack.c.l.b16 %v374
        %v567 = vunpack.c.l.b16 %v375
        %v568 = vunpack.c.l.b16 %v376
        %v569 = vunpack.c.l.b16 %v377
        %v570 = vunpack.c.l.b16 %v378
        %v571 = vunpack.c.l.b16 %v379
        %v572 = vunpack.c.l.b16 %v380
        %v573 = vunpack.c.l.b16 %v381
        %v574 = vunpack.c.l.b16 %v382
        %v575 = vpack.c.b16 %v552, %v551
        %v576 = vpack.c.b16 %v554, %v553
        %v577 = vpack.c.b16 %v556, %v555
        %v578 = vpack.c.b16 %v558, %v557
        %v579 = vpack.c.b16 %v560, %v559
        %v580 = vpack.c.b16 %v562, %v561
        %v581 = vpack.c.b16 %v564, %v563
        %v582 = vpack.c.b16 %v566, %v565
        %v583 = vpack.c.b16 %v568, %v567
        %v584 = vpack.c.b16 %v570, %v569
        %v585 = vpack.c.b16 %v572, %v571
        %v586 = vpack.c.b16 %v574, %v573
        %vm599 = vcmask 523264
        %v601 = vsel %vm599, %v480, 0
        %v604 = vsel %vm599, %v482, 0
        %v607 = vsel %vm599, %v484, 0
        %v610 = vsel %vm599, %v486, 0
        %v613 = vsel %vm599, %v488, 0
        %v616 = vsel %vm599, %v490, 0
        %v619 = vsel %vm599, %v492, 0
        %v622 = vsel %vm599, %v494, 0
        %v625 = vsel %vm599, %v496, 0
        %v628 = vsel %vm599, %v498, 0
        %v631 = vsel %vm599, %v500, 0
        %v634 = vsel %vm599, %v502, 0
        %v637 = vsel %vm599, %v504, 0
        %v640 = vsel %vm599, %v506, 0
        %v643 = vsel %vm599, %v508, 0
        %v646 = vsel %vm599, %v510, 0
        %648 = vmatprep.subr.bf16.mxu0 0
        %649 = vmatpush1.bf16.msra.mxu0 %v575
        %650 = vmatprep.subr.bf16.mxu0 0
        %651 = vmatpush1.bf16.msra.mxu0 %v576
        %652 = vmatprep.subr.bf16.mxu0 0
        %653 = vmatpush1.bf16.msra.mxu0 %v577
        %654 = vmatprep.subr.bf16.mxu0 0
        %655 = vmatpush1.bf16.msra.mxu0 %v578
        %656 = vmatprep.subr.bf16.mxu0 0
        %657 = vmatpush1.bf16.msra.mxu0 %v579
        %658 = vmatprep.subr.bf16.mxu0 0
        %659 = vmatpush1.bf16.msra.mxu0 %v580
        %660 = vmatprep.subr.bf16.mxu0 0
        %661 = vmatpush1.bf16.msra.mxu0 %v581
        %662 = vmatprep.subr.bf16.mxu0 0
        %663 = vmatpush1.bf16.msra.mxu0 %v582
        %664 = vmatprep.subr.bf16.mxu0 0
        %665 = vmatpush1.bf16.msra.mxu0 %v583
        %666 = vmatprep.subr.bf16.mxu0 0
        %667 = vmatpush1.bf16.msra.mxu0 %v584
        %668 = vmatprep.subr.bf16.mxu0 0
        %669 = vmatpush1.bf16.msra.mxu0 %v585
        %670 = vmatprep.subr.bf16.mxu0 0
        %671 = vmatpush1.bf16.msra.mxu0 %v586
        %672 = vmatprep.subr.bf16.mxu0 0
        %673 = vmatpush1.bf16.msra.mxu0 0
        %674 = vmatprep.subr.bf16.mxu0 0
        %675 = vmatpush1.bf16.msra.mxu0 0
        %676 = vmatprep.subr.bf16.mxu0 0
        %677 = vmatpush1.bf16.msra.mxu0 0
        %678 = vmatprep.subr.bf16.mxu0 0
        %679 = vmatpush1.bf16.msra.mxu0 0
        %680 = vmatprep.mubr.bf16.mxu0 %v601
        %681 = vmatmul.mubr.bf16.gmra.mrb[0].mxu0 %v479
        %v682 = vpop.f32.mrb[0].mxu0
        %v683 = vadd.f32 0.0, %v682
        %v684 = vpop.f32.mrb[0].mxu0
        %v685 = vpop.f32.mrb[0].mxu0
        %v686 = vadd.f32 0.0, %v685
        %v687 = vpop.f32.mrb[0].mxu0
        %688 = vmatprep.mubr.bf16.mxu0 %v604
        %689 = vmatmul.mubr.bf16.gmra.mrb[0].mxu0 %v481
        %v690 = vpop.f32.mrb[0].mxu0
        %v691 = vadd.f32 0.0, %v690
        %v692 = vpop.f32.mrb[0].mxu0
        %v693 = vpop.f32.mrb[0].mxu0
        %v694 = vadd.f32 0.0, %v693
        %v695 = vpop.f32.mrb[0].mxu0
        %696 = vmatprep.mubr.bf16.mxu0 %v607
        %697 = vmatmul.mubr.bf16.gmra.mrb[0].mxu0 %v483
        %v698 = vpop.f32.mrb[0].mxu0
        %v699 = vadd.f32 0.0, %v698
        %v700 = vpop.f32.mrb[0].mxu0
        %v701 = vpop.f32.mrb[0].mxu0
        %v702 = vadd.f32 0.0, %v701
        %v703 = vpop.f32.mrb[0].mxu0
        %704 = vmatprep.mubr.bf16.mxu0 %v610
        %705 = vmatmul.mubr.bf16.gmra.mrb[0].mxu0 %v485
        %v706 = vpop.f32.mrb[0].mxu0
        %v707 = vadd.f32 0.0, %v706
        %v708 = vpop.f32.mrb[0].mxu0
        %v709 = vpop.f32.mrb[0].mxu0
        %v710 = vadd.f32 0.0, %v709
        %v711 = vpop.f32.mrb[0].mxu0
        %712 = vmatprep.mubr.bf16.mxu0 %v613
        %713 = vmatmul.mubr.bf16.gmra.mrb[0].mxu0 %v487
        %v714 = vpop.f32.mrb[0].mxu0
        %v715 = vadd.f32 0.0, %v714
        %v716 = vpop.f32.mrb[0].mxu0
        %v717 = vpop.f32.mrb[0].mxu0
        %v718 = vadd.f32 0.0, %v717
        %v719 = vpop.f32.mrb[0].mxu0
        %720 = vmatprep.mubr.bf16.mxu0 %v616
        %721 = vmatmul.mubr.bf16.gmra.mrb[0].mxu0 %v489
        %v722 = vpop.f32.mrb[0].mxu0
        %v723 = vadd.f32 0.0, %v722
        %v724 = vpop.f32.mrb[0].mxu0
        %v725 = vpop.f32.mrb[0].mxu0
        %v726 = vadd.f32 0.0, %v725
        %v727 = vpop.f32.mrb[0].mxu0
        %728 = vmatprep.mubr.bf16.mxu0 %v619
        %729 = vmatmul.mubr.bf16.gmra.mrb[0].mxu0 %v491
        %v730 = vpop.f32.mrb[0].mxu0
        %v731 = vadd.f32 0.0, %v730
        %v732 = vpop.f32.mrb[0].mxu0
        %v733 = vpop.f32.mrb[0].mxu0
        %v734 = vadd.f32 0.0, %v733
        %v735 = vpop.f32.mrb[0].mxu0
        %736 = vmatprep.mubr.bf16.mxu0 %v622
        %737 = vmatmul.mubr.bf16.gmra.mrb[0].mxu0 %v493
        %v738 = vpop.f32.mrb[0].mxu0
        %v739 = vadd.f32 0.0, %v738
        %v740 = vpop.f32.mrb[0].mxu0
        %v741 = vpop.f32.mrb[0].mxu0
        %v742 = vadd.f32 0.0, %v741
        %v743 = vpop.f32.mrb[0].mxu0
        %744 = vmatprep.mubr.bf16.mxu0 %v625
        %745 = vmatmul.mubr.bf16.gmra.mrb[0].mxu0 %v495
        %v746 = vpop.f32.mrb[0].mxu0
        %v747 = vadd.f32 0.0, %v746
        %v748 = vpop.f32.mrb[0].mxu0
        %v749 = vpop.f32.mrb[0].mxu0
        %v750 = vadd.f32 0.0, %v749
        %v751 = vpop.f32.mrb[0].mxu0
        %752 = vmatprep.mubr.bf16.mxu0 %v628
        %753 = vmatmul.mubr.bf16.gmra.mrb[0].mxu0 %v497
        %v754 = vpop.f32.mrb[0].mxu0
        %v755 = vadd.f32 0.0, %v754
        %v756 = vpop.f32.mrb[0].mxu0
        %v757 = vpop.f32.mrb[0].mxu0
        %v758 = vadd.f32 0.0, %v757
        %v759 = vpop.f32.mrb[0].mxu0
        %760 = vmatprep.mubr.bf16.mxu0 %v631
        %761 = vmatmul.mubr.bf16.gmra.mrb[0].mxu0 %v499
        %v762 = vpop.f32.mrb[0].mxu0
        %v763 = vadd.f32 0.0, %v762
        %v764 = vpop.f32.mrb[0].mxu0
        %v765 = vpop.f32.mrb[0].mxu0
        %v766 = vadd.f32 0.0, %v765
        %v767 = vpop.f32.mrb[0].mxu0
        %768 = vmatprep.mubr.bf16.mxu0 %v634
        %769 = vmatmul.mubr.bf16.gmra.mrb[0].mxu0 %v501
        %v770 = vpop.f32.mrb[0].mxu0
        %v771 = vadd.f32 0.0, %v770
        %v772 = vpop.f32.mrb[0].mxu0
        %v773 = vpop.f32.mrb[0].mxu0
        %v774 = vadd.f32 0.0, %v773
        %v775 = vpop.f32.mrb[0].mxu0
        %776 = vmatprep.mubr.bf16.mxu0 %v637
        %777 = vmatmul.mubr.bf16.gmra.mrb[0].mxu0 %v503
        %v778 = vpop.f32.mrb[0].mxu0
        %v779 = vadd.f32 0.0, %v778
        %v780 = vpop.f32.mrb[0].mxu0
        %v781 = vpop.f32.mrb[0].mxu0
        %v782 = vadd.f32 0.0, %v781
        %v783 = vpop.f32.mrb[0].mxu0
        %784 = vmatprep.mubr.bf16.mxu0 %v640
        %785 = vmatmul.mubr.bf16.gmra.mrb[0].mxu0 %v505
        %v786 = vpop.f32.mrb[0].mxu0
        %v787 = vadd.f32 0.0, %v786
        %v788 = vpop.f32.mrb[0].mxu0
        %v789 = vpop.f32.mrb[0].mxu0
        %v790 = vadd.f32 0.0, %v789
        %v791 = vpop.f32.mrb[0].mxu0
        %792 = vmatprep.mubr.bf16.mxu0 %v643
        %793 = vmatmul.mubr.bf16.gmra.mrb[0].mxu0 %v507
        %v794 = vpop.f32.mrb[0].mxu0
        %v795 = vadd.f32 0.0, %v794
        %v796 = vpop.f32.mrb[0].mxu0
        %v797 = vpop.f32.mrb[0].mxu0
        %v798 = vadd.f32 0.0, %v797
        %v799 = vpop.f32.mrb[0].mxu0
        %800 = vmatprep.mubr.bf16.mxu0 %v646
        %801 = vmatmul.mubr.bf16.gmra.mrb[0].mxu0 %v509
        %v802 = vpop.f32.mrb[0].mxu0
        %v803 = vadd.f32 0.0, %v802
        %v804 = vpop.f32.mrb[0].mxu0
        %v805 = vpop.f32.mrb[0].mxu0
        %v806 = vadd.f32 0.0, %v805
        %v807 = vpop.f32.mrb[0].mxu0
        %808 = vdwg.mxu0
        %v841 = vunpack.c.l.b16 %v264
        %v842 = vunpack.c.h.b16 %v264
        %v843 = vunpack.c.l.b16 %v265
        %v844 = vunpack.c.h.b16 %v265
        %v845 = vunpack.c.l.b16 %v266
        %v846 = vunpack.c.h.b16 %v266
        %v847 = vunpack.c.l.b16 %v267
        %v848 = vunpack.c.h.b16 %v267
        %v849 = vunpack.c.l.b16 %v268
        %v850 = vunpack.c.h.b16 %v268
        %v851 = vunpack.c.l.b16 %v269
        %v852 = vunpack.c.h.b16 %v269
        %v853 = vunpack.c.l.b16 %v270
        %v854 = vunpack.c.h.b16 %v270
        %v855 = vunpack.c.l.b16 %v271
        %v856 = vunpack.c.h.b16 %v271
        %v857 = vunpack.c.l.b16 %v272
        %v858 = vunpack.c.h.b16 %v272
        %v859 = vunpack.c.l.b16 %v273
        %v860 = vunpack.c.h.b16 %v273
        %v861 = vunpack.c.l.b16 %v274
        %v862 = vunpack.c.h.b16 %v274
        %v863 = vunpack.c.l.b16 %v275
        %v864 = vunpack.c.h.b16 %v275
        %v865 = vunpack.c.l.b16 %v276
        %v866 = vunpack.c.h.b16 %v276
        %v867 = vunpack.c.l.b16 %v277
        %v868 = vunpack.c.h.b16 %v277
        %v869 = vunpack.c.l.b16 %v278
        %v870 = vunpack.c.h.b16 %v278
        %v871 = vunpack.c.l.b16 %v279
        %v872 = vunpack.c.h.b16 %v279
        %v873 = vunpack.c.l.b16 %v280
        %v874 = vunpack.c.h.b16 %v280
        %v875 = vunpack.c.l.b16 %v281
        %v876 = vunpack.c.h.b16 %v281
        %v877 = vunpack.c.l.b16 %v282
        %v878 = vunpack.c.h.b16 %v282
        %v879 = vunpack.c.l.b16 %v283
        %v880 = vunpack.c.h.b16 %v283
        %v881 = vunpack.c.l.b16 %v284
        %v882 = vunpack.c.h.b16 %v284
        %v883 = vunpack.c.l.b16 %v285
        %v884 = vunpack.c.h.b16 %v285
        %v885 = vunpack.c.l.b16 %v286
        %v886 = vunpack.c.h.b16 %v286
        %v887 = vunpack.c.l.b16 %v287
        %v888 = vunpack.c.h.b16 %v287
        %v889 = vunpack.c.l.b16 %v288
        %v890 = vunpack.c.h.b16 %v288
        %v891 = vunpack.c.l.b16 %v289
        %v892 = vunpack.c.h.b16 %v289
        %v893 = vunpack.c.l.b16 %v290
        %v894 = vunpack.c.h.b16 %v290
        %v895 = vunpack.c.l.b16 %v291
        %v896 = vunpack.c.h.b16 %v291
        %v897 = vunpack.c.l.b16 %v292
        %v898 = vunpack.c.h.b16 %v292
        %v899 = vunpack.c.l.b16 %v293
        %v900 = vunpack.c.h.b16 %v293
        %v901 = vunpack.c.l.b16 %v294
        %v902 = vunpack.c.h.b16 %v294
        %v903 = vunpack.c.l.b16 %v295
        %v904 = vunpack.c.h.b16 %v295
        %v905 = vpack.c.b16 %v843, %v841
        %v906 = vpack.c.b16 %v844, %v842
        %v907 = vpack.c.b16 %v847, %v845
        %v908 = vpack.c.b16 %v848, %v846
        %v909 = vpack.c.b16 %v851, %v849
        %v910 = vpack.c.b16 %v852, %v850
        %v911 = vpack.c.b16 %v855, %v853
        %v912 = vpack.c.b16 %v856, %v854
        %v913 = vpack.c.b16 %v859, %v857
        %v914 = vpack.c.b16 %v860, %v858
        %v915 = vpack.c.b16 %v863, %v861
        %v916 = vpack.c.b16 %v864, %v862
        %v917 = vpack.c.b16 %v867, %v865
        %v918 = vpack.c.b16 %v868, %v866
        %v919 = vpack.c.b16 %v871, %v869
        %v920 = vpack.c.b16 %v872, %v870
        %v921 = vpack.c.b16 %v875, %v873
        %v922 = vpack.c.b16 %v876, %v874
        %v923 = vpack.c.b16 %v879, %v877
        %v924 = vpack.c.b16 %v880, %v878
        %v925 = vpack.c.b16 %v883, %v881
        %v926 = vpack.c.b16 %v884, %v882
        %v927 = vpack.c.b16 %v887, %v885
        %v928 = vpack.c.b16 %v888, %v886
        %v929 = vpack.c.b16 %v891, %v889
        %v930 = vpack.c.b16 %v892, %v890
        %v931 = vpack.c.b16 %v895, %v893
        %v932 = vpack.c.b16 %v896, %v894
        %v933 = vpack.c.b16 %v899, %v897
        %v934 = vpack.c.b16 %v900, %v898
        %v935 = vpack.c.b16 %v903, %v901
        %v936 = vpack.c.b16 %v904, %v902
        %v977 = vunpack.c.l.b16 %v296
        %v978 = vunpack.c.l.b16 %v297
        %v979 = vunpack.c.l.b16 %v298
        %v980 = vunpack.c.l.b16 %v299
        %v981 = vunpack.c.l.b16 %v300
        %v982 = vunpack.c.l.b16 %v301
        %v983 = vunpack.c.l.b16 %v302
        %v984 = vunpack.c.l.b16 %v303
        %v985 = vunpack.c.l.b16 %v304
        %v986 = vunpack.c.l.b16 %v305
        %v987 = vunpack.c.l.b16 %v306
        %v988 = vunpack.c.l.b16 %v307
        %v989 = vunpack.c.l.b16 %v308
        %v990 = vunpack.c.l.b16 %v309
        %v991 = vunpack.c.l.b16 %v310
        %v992 = vunpack.c.l.b16 %v311
        %v993 = vunpack.c.l.b16 %v312
        %v994 = vunpack.c.l.b16 %v313
        %v995 = vunpack.c.l.b16 %v314
        %v996 = vunpack.c.l.b16 %v315
        %v997 = vunpack.c.l.b16 %v316
        %v998 = vunpack.c.l.b16 %v317
        %v999 = vunpack.c.l.b16 %v318
        %v1000 = vunpack.c.l.b16 %v319
        %v1001 = vpack.c.b16 %v978, %v977
        %v1002 = vpack.c.b16 %v980, %v979
        %v1003 = vpack.c.b16 %v982, %v981
        %v1004 = vpack.c.b16 %v984, %v983
        %v1005 = vpack.c.b16 %v986, %v985
        %v1006 = vpack.c.b16 %v988, %v987
        %v1007 = vpack.c.b16 %v990, %v989
        %v1008 = vpack.c.b16 %v992, %v991
        %v1009 = vpack.c.b16 %v994, %v993
        %v1010 = vpack.c.b16 %v996, %v995
        %v1011 = vpack.c.b16 %v998, %v997
        %v1012 = vpack.c.b16 %v1000, %v999
        %v1026 = vsel %vm599, %v906, 0
        %v1029 = vsel %vm599, %v908, 0
        %v1032 = vsel %vm599, %v910, 0
        %v1035 = vsel %vm599, %v912, 0
        %v1038 = vsel %vm599, %v914, 0
        %v1041 = vsel %vm599, %v916, 0
        %v1044 = vsel %vm599, %v918, 0
        %v1047 = vsel %vm599, %v920, 0
        %v1050 = vsel %vm599, %v922, 0
        %v1053 = vsel %vm599, %v924, 0
        %v1056 = vsel %vm599, %v926, 0
        %v1059 = vsel %vm599, %v928, 0
        %v1062 = vsel %vm599, %v930, 0
        %v1065 = vsel %vm599, %v932, 0
        %v1068 = vsel %vm599, %v934, 0
        %v1071 = vsel %vm599, %v936, 0
        %1073 = vmatprep.subr.bf16.mxu0 0
        %1074 = vmatpush1.bf16.msra.mxu0 %v1001
        %1075 = vmatprep.subr.bf16.mxu0 0
        %1076 = vmatpush1.bf16.msra.mxu0 %v1002
        %1077 = vmatprep.subr.bf16.mxu0 0
        %1078 = vmatpush1.bf16.msra.mxu0 %v1003
        %1079 = vmatprep.subr.bf16.mxu0 0
        %1080 = vmatpush1.bf16.msra.mxu0 %v1004
        %1081 = vmatprep.subr.bf16.mxu0 0
        %1082 = vmatpush1.bf16.msra.mxu0 %v1005
        %1083 = vmatprep.subr.bf16.mxu0 0
        %1084 = vmatpush1.bf16.msra.mxu0 %v1006
        %1085 = vmatprep.subr.bf16.mxu0 0
        %1086 = vmatpush1.bf16.msra.mxu0 %v1007
        %1087 = vmatprep.subr.bf16.mxu0 0
        %1088 = vmatpush1.bf16.msra.mxu0 %v1008
        %1089 = vmatprep.subr.bf16.mxu0 0
        %1090 = vmatpush1.bf16.msra.mxu0 %v1009
        %1091 = vmatprep.subr.bf16.mxu0 0
        %1092 = vmatpush1.bf16.msra.mxu0 %v1010
        %1093 = vmatprep.subr.bf16.mxu0 0
        %1094 = vmatpush1.bf16.msra.mxu0 %v1011
        %1095 = vmatprep.subr.bf16.mxu0 0
        %1096 = vmatpush1.bf16.msra.mxu0 %v1012
        %1097 = vmatprep.subr.bf16.mxu0 0
        %1098 = vmatpush1.bf16.msra.mxu0 0
        %1099 = vmatprep.subr.bf16.mxu0 0
        %1100 = vmatpush1.bf16.msra.mxu0 0
        %1101 = vmatprep.subr.bf16.mxu0 0
        %1102 = vmatpush1.bf16.msra.mxu0 0
        %1103 = vmatprep.subr.bf16.mxu0 0
        %1104 = vmatpush1.bf16.msra.mxu0 0
        %1105 = vmatprep.mubr.bf16.mxu0 %v1026
        %1106 = vmatmul.mubr.bf16.gmra.mrb[0].mxu0 %v905
        %v1107 = vpop.f32.mrb[0].mxu0
        %v1108 = vadd.f32 %v683, %v1107
        %v1109 = vpop.f32.mrb[0].mxu0
        %v1110 = vpop.f32.mrb[0].mxu0
        %v1111 = vadd.f32 %v686, %v1110
        %v1112 = vpop.f32.mrb[0].mxu0
        %1113 = vmatprep.mubr.bf16.mxu0 %v1029
        %1114 = vmatmul.mubr.bf16.gmra.mrb[0].mxu0 %v907
        %v1115 = vpop.f32.mrb[0].mxu0
        %v1116 = vadd.f32 %v691, %v1115
        %v1117 = vpop.f32.mrb[0].mxu0
        %v1118 = vpop.f32.mrb[0].mxu0
        %v1119 = vadd.f32 %v694, %v1118
        %v1120 = vpop.f32.mrb[0].mxu0
        %1121 = vmatprep.mubr.bf16.mxu0 %v1032
        %1122 = vmatmul.mubr.bf16.gmra.mrb[0].mxu0 %v909
        %v1123 = vpop.f32.mrb[0].mxu0
        %v1124 = vadd.f32 %v699, %v1123
        %v1125 = vpop.f32.mrb[0].mxu0
        %v1126 = vpop.f32.mrb[0].mxu0
        %v1127 = vadd.f32 %v702, %v1126
        %v1128 = vpop.f32.mrb[0].mxu0
        %1129 = vmatprep.mubr.bf16.mxu0 %v1035
        %1130 = vmatmul.mubr.bf16.gmra.mrb[0].mxu0 %v911
        %v1131 = vpop.f32.mrb[0].mxu0
        %v1132 = vadd.f32 %v707, %v1131
        %v1133 = vpop.f32.mrb[0].mxu0
        %v1134 = vpop.f32.mrb[0].mxu0
        %v1135 = vadd.f32 %v710, %v1134
        %v1136 = vpop.f32.mrb[0].mxu0
        %1137 = vmatprep.mubr.bf16.mxu0 %v1038
        %1138 = vmatmul.mubr.bf16.gmra.mrb[0].mxu0 %v913
        %v1139 = vpop.f32.mrb[0].mxu0
        %v1140 = vadd.f32 %v715, %v1139
        %v1141 = vpop.f32.mrb[0].mxu0
        %v1142 = vpop.f32.mrb[0].mxu0
        %v1143 = vadd.f32 %v718, %v1142
        %v1144 = vpop.f32.mrb[0].mxu0
        %1145 = vmatprep.mubr.bf16.mxu0 %v1041
        %1146 = vmatmul.mubr.bf16.gmra.mrb[0].mxu0 %v915
        %v1147 = vpop.f32.mrb[0].mxu0
        %v1148 = vadd.f32 %v723, %v1147
        %v1149 = vpop.f32.mrb[0].mxu0
        %v1150 = vpop.f32.mrb[0].mxu0
        %v1151 = vadd.f32 %v726, %v1150
        %v1152 = vpop.f32.mrb[0].mxu0
        %1153 = vmatprep.mubr.bf16.mxu0 %v1044
        %1154 = vmatmul.mubr.bf16.gmra.mrb[0].mxu0 %v917
        %v1155 = vpop.f32.mrb[0].mxu0
        %v1156 = vadd.f32 %v731, %v1155
        %v1157 = vpop.f32.mrb[0].mxu0
        %v1158 = vpop.f32.mrb[0].mxu0
        %v1159 = vadd.f32 %v734, %v1158
        %v1160 = vpop.f32.mrb[0].mxu0
        %1161 = vmatprep.mubr.bf16.mxu0 %v1047
        %1162 = vmatmul.mubr.bf16.gmra.mrb[0].mxu0 %v919
        %v1163 = vpop.f32.mrb[0].mxu0
        %v1164 = vadd.f32 %v739, %v1163
        %v1165 = vpop.f32.mrb[0].mxu0
        %v1166 = vpop.f32.mrb[0].mxu0
        %v1167 = vadd.f32 %v742, %v1166
        %v1168 = vpop.f32.mrb[0].mxu0
        %1169 = vmatprep.mubr.bf16.mxu0 %v1050
        %1170 = vmatmul.mubr.bf16.gmra.mrb[0].mxu0 %v921
        %v1171 = vpop.f32.mrb[0].mxu0
        %v1172 = vadd.f32 %v747, %v1171
        %v1173 = vpop.f32.mrb[0].mxu0
        %v1174 = vpop.f32.mrb[0].mxu0
        %v1175 = vadd.f32 %v750, %v1174
        %v1176 = vpop.f32.mrb[0].mxu0
        %1177 = vmatprep.mubr.bf16.mxu0 %v1053
        %1178 = vmatmul.mubr.bf16.gmra.mrb[0].mxu0 %v923
        %v1179 = vpop.f32.mrb[0].mxu0
        %v1180 = vadd.f32 %v755, %v1179
        %v1181 = vpop.f32.mrb[0].mxu0
        %v1182 = vpop.f32.mrb[0].mxu0
        %v1183 = vadd.f32 %v758, %v1182
        %v1184 = vpop.f32.mrb[0].mxu0
        %1185 = vmatprep.mubr.bf16.mxu0 %v1056
        %1186 = vmatmul.mubr.bf16.gmra.mrb[0].mxu0 %v925
        %v1187 = vpop.f32.mrb[0].mxu0
        %v1188 = vadd.f32 %v763, %v1187
        %v1189 = vpop.f32.mrb[0].mxu0
        %v1190 = vpop.f32.mrb[0].mxu0
        %v1191 = vadd.f32 %v766, %v1190
        %v1192 = vpop.f32.mrb[0].mxu0
        %1193 = vmatprep.mubr.bf16.mxu0 %v1059
        %1194 = vmatmul.mubr.bf16.gmra.mrb[0].mxu0 %v927
        %v1195 = vpop.f32.mrb[0].mxu0
        %v1196 = vadd.f32 %v771, %v1195
        %v1197 = vpop.f32.mrb[0].mxu0
        %v1198 = vpop.f32.mrb[0].mxu0
        %v1199 = vadd.f32 %v774, %v1198
        %v1200 = vpop.f32.mrb[0].mxu0
        %1201 = vmatprep.mubr.bf16.mxu0 %v1062
        %1202 = vmatmul.mubr.bf16.gmra.mrb[0].mxu0 %v929
        %v1203 = vpop.f32.mrb[0].mxu0
        %v1204 = vadd.f32 %v779, %v1203
        %v1205 = vpop.f32.mrb[0].mxu0
        %v1206 = vpop.f32.mrb[0].mxu0
        %v1207 = vadd.f32 %v782, %v1206
        %v1208 = vpop.f32.mrb[0].mxu0
        %1209 = vmatprep.mubr.bf16.mxu0 %v1065
        %1210 = vmatmul.mubr.bf16.gmra.mrb[0].mxu0 %v931
        %v1211 = vpop.f32.mrb[0].mxu0
        %v1212 = vadd.f32 %v787, %v1211
        %v1213 = vpop.f32.mrb[0].mxu0
        %v1214 = vpop.f32.mrb[0].mxu0
        %v1215 = vadd.f32 %v790, %v1214
        %v1216 = vpop.f32.mrb[0].mxu0
        %1217 = vmatprep.mubr.bf16.mxu0 %v1068
        %1218 = vmatmul.mubr.bf16.gmra.mrb[0].mxu0 %v933
        %v1219 = vpop.f32.mrb[0].mxu0
        %v1220 = vadd.f32 %v795, %v1219
        %v1221 = vpop.f32.mrb[0].mxu0
        %v1222 = vpop.f32.mrb[0].mxu0
        %v1223 = vadd.f32 %v798, %v1222
        %v1224 = vpop.f32.mrb[0].mxu0
        %1225 = vmatprep.mubr.bf16.mxu0 %v1071
        %1226 = vmatmul.mubr.bf16.gmra.mrb[0].mxu0 %v935
        %v1227 = vpop.f32.mrb[0].mxu0
        %v1228 = vadd.f32 %v803, %v1227
        %v1229 = vpop.f32.mrb[0].mxu0
        %v1230 = vpop.f32.mrb[0].mxu0
        %v1231 = vadd.f32 %v806, %v1230
        %v1232 = vpop.f32.mrb[0].mxu0
        %1233 = vdwg.mxu0
        %s1234 = sadd.s32 %s258, 32
        %s1235 = sshra.s32 %s1234, 3
        %s1236 = sand.u32 %s1234, 7
        %s1237 = smul.u32 %s1235, 2
        %s1238 = smul.addr %s1237, 4
        %s1239 = scalar_lea.vmem %s223, %s1238 [#allocation2]
        %v1240 = vld [vmem:[%s1239] sm:$0xff]
        %v1241 = vld [vmem:[%s1239 + $0x8] sm:$0xff]
        %v1242 = vld [vmem:[%s1239 + $0x10] sm:$0xff]
        %v1243 = vld [vmem:[%s1239 + $0x18] sm:$0xff]
        %v1244 = vld [vmem:[%s1239 + $0x20] sm:$0xff]
        %v1245 = vld [vmem:[%s1239 + $0x28] sm:$0xff]
        %v1246 = vld [vmem:[%s1239 + $0x30] sm:$0xff]
        %v1247 = vld [vmem:[%s1239 + $0x38] sm:$0xff]
        %v1248 = vld [vmem:[%s1239 + $0x40] sm:$0xff]
        %v1249 = vld [vmem:[%s1239 + $0x48] sm:$0xff]
        %v1250 = vld [vmem:[%s1239 + $0x50] sm:$0xff]
        %v1251 = vld [vmem:[%s1239 + $0x58] sm:$0xff]
        %v1252 = vld [vmem:[%s1239 + $0x60] sm:$0xff]
        %v1253 = vld [vmem:[%s1239 + $0x68] sm:$0xff]
        %v1254 = vld [vmem:[%s1239 + $0x70] sm:$0xff]
        %v1255 = vld [vmem:[%s1239 + $0x78] sm:$0xff]
        %v1256 = vld [vmem:[%s1239 + $0x80] sm:$0xff]
        %v1257 = vld [vmem:[%s1239 + $0x88] sm:$0xff]
        %v1258 = vld [vmem:[%s1239 + $0x90] sm:$0xff]
        %v1259 = vld [vmem:[%s1239 + $0x98] sm:$0xff]
        %v1260 = vld [vmem:[%s1239 + $0xa0] sm:$0xff]
        %v1261 = vld [vmem:[%s1239 + $0xa8] sm:$0xff]
        %v1262 = vld [vmem:[%s1239 + $0xb0] sm:$0xff]
        %v1263 = vld [vmem:[%s1239 + $0xb8] sm:$0xff]
        %v1264 = vld [vmem:[%s1239 + $0xc0] sm:$0xff]
        %v1265 = vld [vmem:[%s1239 + $0xc8] sm:$0xff]
        %v1266 = vld [vmem:[%s1239 + $0xd0] sm:$0xff]
        %v1267 = vld [vmem:[%s1239 + $0xd8] sm:$0xff]
        %v1268 = vld [vmem:[%s1239 + $0xe0] sm:$0xff]
        %v1269 = vld [vmem:[%s1239 + $0xe8] sm:$0xff]
        %v1270 = vld [vmem:[%s1239 + $0xf0] sm:$0xff]
        %v1271 = vld [vmem:[%s1239 + $0xf8] sm:$0xff]
        %s1272 = scalar_lea.vmem [#allocation5], 192
        %v1273 = vld [vmem:[%s1272] sm:$0xf]
        %v1274 = vld [vmem:[%s1272 + $0x4] sm:$0xf]
        %v1275 = vld [vmem:[%s1272 + $0x8] sm:$0xf]
        %v1276 = vld [vmem:[%s1272 + $0xc] sm:$0xf]
        %v1277 = vld [vmem:[%s1272 + $0x10] sm:$0xf]
        %v1278 = vld [vmem:[%s1272 + $0x14] sm:$0xf]
        %v1279 = vld [vmem:[%s1272 + $0x18] sm:$0xf]
        %v1280 = vld [vmem:[%s1272 + $0x1c] sm:$0xf]
        %v1281 = vld [vmem:[%s1272 + $0x20] sm:$0xf]
        %v1282 = vld [vmem:[%s1272 + $0x24] sm:$0xf]
        %v1283 = vld [vmem:[%s1272 + $0x28] sm:$0xf]
        %v1284 = vld [vmem:[%s1272 + $0x2c] sm:$0xf]
        %v1285 = vld [vmem:[%s1272 + $0x30] sm:$0xf]
        %v1286 = vld [vmem:[%s1272 + $0x34] sm:$0xf]
        %v1287 = vld [vmem:[%s1272 + $0x38] sm:$0xf]
        %v1288 = vld [vmem:[%s1272 + $0x3c] sm:$0xf]
        %v1289 = vld [vmem:[%s1272 + $0x40] sm:$0xf]
        %v1290 = vld [vmem:[%s1272 + $0x44] sm:$0xf]
        %v1291 = vld [vmem:[%s1272 + $0x48] sm:$0xf]
        %v1292 = vld [vmem:[%s1272 + $0x4c] sm:$0xf]
        %v1293 = vld [vmem:[%s1272 + $0x50] sm:$0xf]
        %v1294 = vld [vmem:[%s1272 + $0x54] sm:$0xf]
        %v1295 = vld [vmem:[%s1272 + $0x58] sm:$0xf]
        %v1296 = vld [vmem:[%s1272 + $0x5c] sm:$0xf]
        %v1329 = vunpack.c.l.b16 %v1240
        %v1330 = vunpack.c.h.b16 %v1240
        %v1331 = vunpack.c.l.b16 %v1241
        %v1332 = vunpack.c.h.b16 %v1241
        %v1333 = vunpack.c.l.b16 %v1242
        %v1334 = vunpack.c.h.b16 %v1242
        %v1335 = vunpack.c.l.b16 %v1243
        %v1336 = vunpack.c.h.b16 %v1243
        %v1337 = vunpack.c.l.b16 %v1244
        %v1338 = vunpack.c.h.b16 %v1244
        %v1339 = vunpack.c.l.b16 %v1245
        %v1340 = vunpack.c.h.b16 %v1245
        %v1341 = vunpack.c.l.b16 %v1246
        %v1342 = vunpack.c.h.b16 %v1246
        %v1343 = vunpack.c.l.b16 %v1247
        %v1344 = vunpack.c.h.b16 %v1247
        %v1345 = vunpack.c.l.b16 %v1248
        %v1346 = vunpack.c.h.b16 %v1248
        %v1347 = vunpack.c.l.b16 %v1249
        %v1348 = vunpack.c.h.b16 %v1249
        %v1349 = vunpack.c.l.b16 %v1250
        %v1350 = vunpack.c.h.b16 %v1250
        %v1351 = vunpack.c.l.b16 %v1251
        %v1352 = vunpack.c.h.b16 %v1251
        %v1353 = vunpack.c.l.b16 %v1252
        %v1354 = vunpack.c.h.b16 %v1252
        %v1355 = vunpack.c.l.b16 %v1253
        %v1356 = vunpack.c.h.b16 %v1253
        %v1357 = vunpack.c.l.b16 %v1254
        %v1358 = vunpack.c.h.b16 %v1254
        %v1359 = vunpack.c.l.b16 %v1255
        %v1360 = vunpack.c.h.b16 %v1255
        %v1361 = vunpack.c.l.b16 %v1256
        %v1362 = vunpack.c.h.b16 %v1256
        %v1363 = vunpack.c.l.b16 %v1257
        %v1364 = vunpack.c.h.b16 %v1257
        %v1365 = vunpack.c.l.b16 %v1258
        %v1366 = vunpack.c.h.b16 %v1258
        %v1367 = vunpack.c.l.b16 %v1259
        %v1368 = vunpack.c.h.b16 %v1259
        %v1369 = vunpack.c.l.b16 %v1260
        %v1370 = vunpack.c.h.b16 %v1260
        %v1371 = vunpack.c.l.b16 %v1261
        %v1372 = vunpack.c.h.b16 %v1261
        %v1373 = vunpack.c.l.b16 %v1262
        %v1374 = vunpack.c.h.b16 %v1262
        %v1375 = vunpack.c.l.b16 %v1263
        %v1376 = vunpack.c.h.b16 %v1263
        %v1377 = vunpack.c.l.b16 %v1264
        %v1378 = vunpack.c.h.b16 %v1264
        %v1379 = vunpack.c.l.b16 %v1265
        %v1380 = vunpack.c.h.b16 %v1265
        %v1381 = vunpack.c.l.b16 %v1266
        %v1382 = vunpack.c.h.b16 %v1266
        %v1383 = vunpack.c.l.b16 %v1267
        %v1384 = vunpack.c.h.b16 %v1267
        %v1385 = vunpack.c.l.b16 %v1268
        %v1386 = vunpack.c.h.b16 %v1268
        %v1387 = vunpack.c.l.b16 %v1269
        %v1388 = vunpack.c.h.b16 %v1269
        %v1389 = vunpack.c.l.b16 %v1270
        %v1390 = vunpack.c.h.b16 %v1270
        %v1391 = vunpack.c.l.b16 %v1271
        %v1392 = vunpack.c.h.b16 %v1271
        %v1393 = vpack.c.b16 %v1331, %v1329
        %v1394 = vpack.c.b16 %v1332, %v1330
        %v1395 = vpack.c.b16 %v1335, %v1333
        %v1396 = vpack.c.b16 %v1336, %v1334
        %v1397 = vpack.c.b16 %v1339, %v1337
        %v1398 = vpack.c.b16 %v1340, %v1338
        %v1399 = vpack.c.b16 %v1343, %v1341
        %v1400 = vpack.c.b16 %v1344, %v1342
        %v1401 = vpack.c.b16 %v1347, %v1345
        %v1402 = vpack.c.b16 %v1348, %v1346
        %v1403 = vpack.c.b16 %v1351, %v1349
        %v1404 = vpack.c.b16 %v1352, %v1350
        %v1405 = vpack.c.b16 %v1355, %v1353
        %v1406 = vpack.c.b16 %v1356, %v1354
        %v1407 = vpack.c.b16 %v1359, %v1357
        %v1408 = vpack.c.b16 %v1360, %v1358
        %v1409 = vpack.c.b16 %v1363, %v1361
        %v1410 = vpack.c.b16 %v1364, %v1362
        %v1411 = vpack.c.b16 %v1367, %v1365
        %v1412 = vpack.c.b16 %v1368, %v1366
        %v1413 = vpack.c.b16 %v1371, %v1369
        %v1414 = vpack.c.b16 %v1372, %v1370
        %v1415 = vpack.c.b16 %v1375, %v1373
        %v1416 = vpack.c.b16 %v1376, %v1374
        %v1417 = vpack.c.b16 %v1379, %v1377
        %v1418 = vpack.c.b16 %v1380, %v1378
        %v1419 = vpack.c.b16 %v1383, %v1381
        %v1420 = vpack.c.b16 %v1384, %v1382
        %v1421 = vpack.c.b16 %v1387, %v1385
        %v1422 = vpack.c.b16 %v1388, %v1386
        %v1423 = vpack.c.b16 %v1391, %v1389
        %v1424 = vpack.c.b16 %v1392, %v1390
        %v1465 = vunpack.c.l.b16 %v1273
        %v1466 = vunpack.c.l.b16 %v1274
        %v1467 = vunpack.c.l.b16 %v1275
        %v1468 = vunpack.c.l.b16 %v1276
        %v1469 = vunpack.c.l.b16 %v1277
        %v1470 = vunpack.c.l.b16 %v1278
        %v1471 = vunpack.c.l.b16 %v1279
        %v1472 = vunpack.c.l.b16 %v1280
        %v1473 = vunpack.c.l.b16 %v1281
        %v1474 = vunpack.c.l.b16 %v1282
        %v1475 = vunpack.c.l.b16 %v1283
        %v1476 = vunpack.c.l.b16 %v1284
        %v1477 = vunpack.c.l.b16 %v1285
        %v1478 = vunpack.c.l.b16 %v1286
        %v1479 = vunpack.c.l.b16 %v1287
        %v1480 = vunpack.c.l.b16 %v1288
        %v1481 = vunpack.c.l.b16 %v1289
        %v1482 = vunpack.c.l.b16 %v1290
        %v1483 = vunpack.c.l.b16 %v1291
        %v1484 = vunpack.c.l.b16 %v1292
        %v1485 = vunpack.c.l.b16 %v1293
        %v1486 = vunpack.c.l.b16 %v1294
        %v1487 = vunpack.c.l.b16 %v1295
        %v1488 = vunpack.c.l.b16 %v1296
        %v1489 = vpack.c.b16 %v1466, %v1465
        %v1490 = vpack.c.b16 %v1468, %v1467
        %v1491 = vpack.c.b16 %v1470, %v1469
        %v1492 = vpack.c.b16 %v1472, %v1471
        %v1493 = vpack.c.b16 %v1474, %v1473
        %v1494 = vpack.c.b16 %v1476, %v1475
        %v1495 = vpack.c.b16 %v1478, %v1477
        %v1496 = vpack.c.b16 %v1480, %v1479
        %v1497 = vpack.c.b16 %v1482, %v1481
        %v1498 = vpack.c.b16 %v1484, %v1483
        %v1499 = vpack.c.b16 %v1486, %v1485
        %v1500 = vpack.c.b16 %v1488, %v1487
        %v1514 = vsel %vm599, %v1394, 0
        %v1517 = vsel %vm599, %v1396, 0
        %v1520 = vsel %vm599, %v1398, 0
        %v1523 = vsel %vm599, %v1400, 0
        %v1526 = vsel %vm599, %v1402, 0
        %v1529 = vsel %vm599, %v1404, 0
        %v1532 = vsel %vm599, %v1406, 0
        %v1535 = vsel %vm599, %v1408, 0
        %v1538 = vsel %vm599, %v1410, 0
        %v1541 = vsel %vm599, %v1412, 0
        %v1544 = vsel %vm599, %v1414, 0
        %v1547 = vsel %vm599, %v1416, 0
        %v1550 = vsel %vm599, %v1418, 0
        %v1553 = vsel %vm599, %v1420, 0
        %v1556 = vsel %vm599, %v1422, 0
        %v1559 = vsel %vm599, %v1424, 0
        %1561 = vmatprep.subr.bf16.mxu0 0
        %1562 = vmatpush1.bf16.msra.mxu0 %v1489
        %1563 = vmatprep.subr.bf16.mxu0 0
        %1564 = vmatpush1.bf16.msra.mxu0 %v1490
        %1565 = vmatprep.subr.bf16.mxu0 0
        %1566 = vmatpush1.bf16.msra.mxu0 %v1491
        %1567 = vmatprep.subr.bf16.mxu0 0
        %1568 = vmatpush1.bf16.msra.mxu0 %v1492
        %1569 = vmatprep.subr.bf16.mxu0 0
        %1570 = vmatpush1.bf16.msra.mxu0 %v1493
        %1571 = vmatprep.subr.bf16.mxu0 0
        %1572 = vmatpush1.bf16.msra.mxu0 %v1494
        %1573 = vmatprep.subr.bf16.mxu0 0
        %1574 = vmatpush1.bf16.msra.mxu0 %v1495
        %1575 = vmatprep.subr.bf16.mxu0 0
        %1576 = vmatpush1.bf16.msra.mxu0 %v1496
        %1577 = vmatprep.subr.bf16.mxu0 0
        %1578 = vmatpush1.bf16.msra.mxu0 %v1497
        %1579 = vmatprep.subr.bf16.mxu0 0
        %1580 = vmatpush1.bf16.msra.mxu0 %v1498
        %1581 = vmatprep.subr.bf16.mxu0 0
        %1582 = vmatpush1.bf16.msra.mxu0 %v1499
        %1583 = vmatprep.subr.bf16.mxu0 0
        %1584 = vmatpush1.bf16.msra.mxu0 %v1500
        %1585 = vmatprep.subr.bf16.mxu0 0
        %1586 = vmatpush1.bf16.msra.mxu0 0
        %1587 = vmatprep.subr.bf16.mxu0 0
        %1588 = vmatpush1.bf16.msra.mxu0 0
        %1589 = vmatprep.subr.bf16.mxu0 0
        %1590 = vmatpush1.bf16.msra.mxu0 0
        %1591 = vmatprep.subr.bf16.mxu0 0
        %1592 = vmatpush1.bf16.msra.mxu0 0
        %1593 = vmatprep.mubr.bf16.mxu0 %v1514
        %1594 = vmatmul.mubr.bf16.gmra.mrb[0].mxu0 %v1393
        %v1595 = vpop.f32.mrb[0].mxu0
        %v1596 = vadd.f32 0.0, %v1595
        %v1597 = vpop.f32.mrb[0].mxu0
        %v1598 = vpop.f32.mrb[0].mxu0
        %v1599 = vadd.f32 0.0, %v1598
        %v1600 = vpop.f32.mrb[0].mxu0
        %1601 = vmatprep.mubr.bf16.mxu0 %v1517
        %1602 = vmatmul.mubr.bf16.gmra.mrb[0].mxu0 %v1395
        %v1603 = vpop.f32.mrb[0].mxu0
        %v1604 = vadd.f32 0.0, %v1603
        %v1605 = vpop.f32.mrb[0].mxu0
        %v1606 = vpop.f32.mrb[0].mxu0
        %v1607 = vadd.f32 0.0, %v1606
        %v1608 = vpop.f32.mrb[0].mxu0
        %1609 = vmatprep.mubr.bf16.mxu0 %v1520
        %1610 = vmatmul.mubr.bf16.gmra.mrb[0].mxu0 %v1397
        %v1611 = vpop.f32.mrb[0].mxu0
        %v1612 = vadd.f32 0.0, %v1611
        %v1613 = vpop.f32.mrb[0].mxu0
        %v1614 = vpop.f32.mrb[0].mxu0
        %v1615 = vadd.f32 0.0, %v1614
        %v1616 = vpop.f32.mrb[0].mxu0
        %1617 = vmatprep.mubr.bf16.mxu0 %v1523
        %1618 = vmatmul.mubr.bf16.gmra.mrb[0].mxu0 %v1399
        %v1619 = vpop.f32.mrb[0].mxu0
        %v1620 = vadd.f32 0.0, %v1619
        %v1621 = vpop.f32.mrb[0].mxu0
        %v1622 = vpop.f32.mrb[0].mxu0
        %v1623 = vadd.f32 0.0, %v1622
        %v1624 = vpop.f32.mrb[0].mxu0
        %1625 = vmatprep.mubr.bf16.mxu0 %v1526
        %1626 = vmatmul.mubr.bf16.gmra.mrb[0].mxu0 %v1401
        %v1627 = vpop.f32.mrb[0].mxu0
        %v1628 = vadd.f32 0.0, %v1627
        %v1629 = vpop.f32.mrb[0].mxu0
        %v1630 = vpop.f32.mrb[0].mxu0
        %v1631 = vadd.f32 0.0, %v1630
        %v1632 = vpop.f32.mrb[0].mxu0
        %1633 = vmatprep.mubr.bf16.mxu0 %v1529
        %1634 = vmatmul.mubr.bf16.gmra.mrb[0].mxu0 %v1403
        %v1635 = vpop.f32.mrb[0].mxu0
        %v1636 = vadd.f32 0.0, %v1635
        %v1637 = vpop.f32.mrb[0].mxu0
        %v1638 = vpop.f32.mrb[0].mxu0
        %v1639 = vadd.f32 0.0, %v1638
        %v1640 = vpop.f32.mrb[0].mxu0
        %1641 = vmatprep.mubr.bf16.mxu0 %v1532
        %1642 = vmatmul.mubr.bf16.gmra.mrb[0].mxu0 %v1405
        %v1643 = vpop.f32.mrb[0].mxu0
        %v1644 = vadd.f32 0.0, %v1643
        %v1645 = vpop.f32.mrb[0].mxu0
        %v1646 = vpop.f32.mrb[0].mxu0
        %v1647 = vadd.f32 0.0, %v1646
        %v1648 = vpop.f32.mrb[0].mxu0
        %1649 = vmatprep.mubr.bf16.mxu0 %v1535
        %1650 = vmatmul.mubr.bf16.gmra.mrb[0].mxu0 %v1407
        %v1651 = vpop.f32.mrb[0].mxu0
        %v1652 = vadd.f32 0.0, %v1651
        %v1653 = vpop.f32.mrb[0].mxu0
        %v1654 = vpop.f32.mrb[0].mxu0
        %v1655 = vadd.f32 0.0, %v1654
        %v1656 = vpop.f32.mrb[0].mxu0
        %1657 = vmatprep.mubr.bf16.mxu0 %v1538
        %1658 = vmatmul.mubr.bf16.gmra.mrb[0].mxu0 %v1409
        %v1659 = vpop.f32.mrb[0].mxu0
        %v1660 = vadd.f32 0.0, %v1659
        %v1661 = vpop.f32.mrb[0].mxu0
        %v1662 = vpop.f32.mrb[0].mxu0
        %v1663 = vadd.f32 0.0, %v1662
        %v1664 = vpop.f32.mrb[0].mxu0
        %1665 = vmatprep.mubr.bf16.mxu0 %v1541
        %1666 = vmatmul.mubr.bf16.gmra.mrb[0].mxu0 %v1411
        %v1667 = vpop.f32.mrb[0].mxu0
        %v1668 = vadd.f32 0.0, %v1667
        %v1669 = vpop.f32.mrb[0].mxu0
        %v1670 = vpop.f32.mrb[0].mxu0
        %v1671 = vadd.f32 0.0, %v1670
        %v1672 = vpop.f32.mrb[0].mxu0
        %1673 = vmatprep.mubr.bf16.mxu0 %v1544
        %1674 = vmatmul.mubr.bf16.gmra.mrb[0].mxu0 %v1413
        %v1675 = vpop.f32.mrb[0].mxu0
        %v1676 = vadd.f32 0.0, %v1675
        %v1677 = vpop.f32.mrb[0].mxu0
        %v1678 = vpop.f32.mrb[0].mxu0
        %v1679 = vadd.f32 0.0, %v1678
        %v1680 = vpop.f32.mrb[0].mxu0
        %1681 = vmatprep.mubr.bf16.mxu0 %v1547
        %1682 = vmatmul.mubr.bf16.gmra.mrb[0].mxu0 %v1415
        %v1683 = vpop.f32.mrb[0].mxu0
        %v1684 = vadd.f32 0.0, %v1683
        %v1685 = vpop.f32.mrb[0].mxu0
        %v1686 = vpop.f32.mrb[0].mxu0
        %v1687 = vadd.f32 0.0, %v1686
        %v1688 = vpop.f32.mrb[0].mxu0
        %1689 = vmatprep.mubr.bf16.mxu0 %v1550
        %1690 = vmatmul.mubr.bf16.gmra.mrb[0].mxu0 %v1417
        %v1691 = vpop.f32.mrb[0].mxu0
        %v1692 = vadd.f32 0.0, %v1691
        %v1693 = vpop.f32.mrb[0].mxu0
        %v1694 = vpop.f32.mrb[0].mxu0
        %v1695 = vadd.f32 0.0, %v1694
        %v1696 = vpop.f32.mrb[0].mxu0
        %1697 = vmatprep.mubr.bf16.mxu0 %v1553
        %1698 = vmatmul.mubr.bf16.gmra.mrb[0].mxu0 %v1419
        %v1699 = vpop.f32.mrb[0].mxu0
        %v1700 = vadd.f32 0.0, %v1699
        %v1701 = vpop.f32.mrb[0].mxu0
        %v1702 = vpop.f32.mrb[0].mxu0
        %v1703 = vadd.f32 0.0, %v1702
        %v1704 = vpop.f32.mrb[0].mxu0
        %1705 = vmatprep.mubr.bf16.mxu0 %v1556
        %1706 = vmatmul.mubr.bf16.gmra.mrb[0].mxu0 %v1421
        %v1707 = vpop.f32.mrb[0].mxu0
        %v1708 = vadd.f32 0.0, %v1707
        %v1709 = vpop.f32.mrb[0].mxu0
        %v1710 = vpop.f32.mrb[0].mxu0
        %v1711 = vadd.f32 0.0, %v1710
        %v1712 = vpop.f32.mrb[0].mxu0
        %1713 = vmatprep.mubr.bf16.mxu0 %v1559
        %1714 = vmatmul.mubr.bf16.gmra.mrb[0].mxu0 %v1423
        %v1715 = vpop.f32.mrb[0].mxu0
        %v1716 = vadd.f32 0.0, %v1715
        %v1717 = vpop.f32.mrb[0].mxu0
        %v1718 = vpop.f32.mrb[0].mxu0
        %v1719 = vadd.f32 0.0, %v1718
        %v1720 = vpop.f32.mrb[0].mxu0
        %1721 = vdwg.mxu0
        %v1722 = vadd.f32 %v1108, %v1596
        %v1723 = vadd.f32 %v1111, %v1599
        %v1724 = vadd.f32 %v1116, %v1604
        %v1725 = vadd.f32 %v1119, %v1607
        %v1726 = vadd.f32 %v1124, %v1612
        %v1727 = vadd.f32 %v1127, %v1615
        %v1728 = vadd.f32 %v1132, %v1620
        %v1729 = vadd.f32 %v1135, %v1623
        %v1730 = vadd.f32 %v1140, %v1628
        %v1731 = vadd.f32 %v1143, %v1631
        %v1732 = vadd.f32 %v1148, %v1636
        %v1733 = vadd.f32 %v1151, %v1639
        %v1734 = vadd.f32 %v1156, %v1644
        %v1735 = vadd.f32 %v1159, %v1647
        %v1736 = vadd.f32 %v1164, %v1652
        %v1737 = vadd.f32 %v1167, %v1655
        %v1738 = vadd.f32 %v1172, %v1660
        %v1739 = vadd.f32 %v1175, %v1663
        %v1740 = vadd.f32 %v1180, %v1668
        %v1741 = vadd.f32 %v1183, %v1671
        %v1742 = vadd.f32 %v1188, %v1676
        %v1743 = vadd.f32 %v1191, %v1679
        %v1744 = vadd.f32 %v1196, %v1684
        %v1745 = vadd.f32 %v1199, %v1687
        %v1746 = vadd.f32 %v1204, %v1692
        %v1747 = vadd.f32 %v1207, %v1695
        %v1748 = vadd.f32 %v1212, %v1700
        %v1749 = vadd.f32 %v1215, %v1703
        %v1750 = vadd.f32 %v1220, %v1708
        %v1751 = vadd.f32 %v1223, %v1711
        %v1752 = vadd.f32 %v1228, %v1716
        %v1753 = vadd.f32 %v1231, %v1719
        %v1754 = vld [vmem:[#allocation7] sm:$0x1]
        %v1756 = vlaneseq
        %v1757 = vshrl.u32 %v1756, 7
        %v1758 = vsub.s32 0, %v1757
        %v1759 = vrot.slane %v1754, %v1758
        %v1761 = vadd.f32 %v1722, %v1759
        %v1762 = vadd.f32 %v1723, %v1759
        %v1763 = vadd.f32 %v1724, %v1759
        %v1764 = vadd.f32 %v1725, %v1759
        %v1765 = vadd.f32 %v1726, %v1759
        %v1766 = vadd.f32 %v1727, %v1759
        %v1767 = vadd.f32 %v1728, %v1759
        %v1768 = vadd.f32 %v1729, %v1759
        %v1769 = vadd.f32 %v1730, %v1759
        %v1770 = vadd.f32 %v1731, %v1759
        %v1771 = vadd.f32 %v1732, %v1759
        %v1772 = vadd.f32 %v1733, %v1759
        %v1773 = vadd.f32 %v1734, %v1759
        %v1774 = vadd.f32 %v1735, %v1759
        %v1775 = vadd.f32 %v1736, %v1759
        %v1776 = vadd.f32 %v1737, %v1759
        %v1777 = vadd.f32 %v1738, %v1759
        %v1778 = vadd.f32 %v1739, %v1759
        %v1779 = vadd.f32 %v1740, %v1759
        %v1780 = vadd.f32 %v1741, %v1759
        %v1781 = vadd.f32 %v1742, %v1759
        %v1782 = vadd.f32 %v1743, %v1759
        %v1783 = vadd.f32 %v1744, %v1759
        %v1784 = vadd.f32 %v1745, %v1759
        %v1785 = vadd.f32 %v1746, %v1759
        %v1786 = vadd.f32 %v1747, %v1759
        %v1787 = vadd.f32 %v1748, %v1759
        %v1788 = vadd.f32 %v1749, %v1759
        %v1789 = vadd.f32 %v1750, %v1759
        %v1790 = vadd.f32 %v1751, %v1759
        %v1791 = vadd.f32 %v1752, %v1759
        %v1792 = vadd.f32 %v1753, %v1759
        %v1793 = vmax.f32 %v1761, 0.0
        %v1794 = vmax.f32 %v1762, 0.0
        %v1795 = vmax.f32 %v1763, 0.0
        %v1796 = vmax.f32 %v1764, 0.0
        %v1797 = vmax.f32 %v1765, 0.0
        %v1798 = vmax.f32 %v1766, 0.0
        %v1799 = vmax.f32 %v1767, 0.0
        %v1800 = vmax.f32 %v1768, 0.0
        %v1801 = vmax.f32 %v1769, 0.0
        %v1802 = vmax.f32 %v1770, 0.0
        %v1803 = vmax.f32 %v1771, 0.0
        %v1804 = vmax.f32 %v1772, 0.0
        %v1805 = vmax.f32 %v1773, 0.0
        %v1806 = vmax.f32 %v1774, 0.0
        %v1807 = vmax.f32 %v1775, 0.0
        %v1808 = vmax.f32 %v1776, 0.0
        %v1809 = vmax.f32 %v1777, 0.0
        %v1810 = vmax.f32 %v1778, 0.0
        %v1811 = vmax.f32 %v1779, 0.0
        %v1812 = vmax.f32 %v1780, 0.0
        %v1813 = vmax.f32 %v1781, 0.0
        %v1814 = vmax.f32 %v1782, 0.0
        %v1815 = vmax.f32 %v1783, 0.0
        %v1816 = vmax.f32 %v1784, 0.0
        %v1817 = vmax.f32 %v1785, 0.0
        %v1818 = vmax.f32 %v1786, 0.0
        %v1819 = vmax.f32 %v1787, 0.0
        %v1820 = vmax.f32 %v1788, 0.0
        %v1821 = vmax.f32 %v1789, 0.0
        %v1822 = vmax.f32 %v1790, 0.0
        %v1823 = vmax.f32 %v1791, 0.0
        %v1824 = vmax.f32 %v1792, 0.0
        %v1825 = vpack.c.bf16 %v1794, %v1793
        %v1826 = vpack.c.bf16 %v1796, %v1795
        %v1827 = vpack.c.bf16 %v1798, %v1797
        %v1828 = vpack.c.bf16 %v1800, %v1799
        %v1829 = vpack.c.bf16 %v1802, %v1801
        %v1830 = vpack.c.bf16 %v1804, %v1803
        %v1831 = vpack.c.bf16 %v1806, %v1805
        %v1832 = vpack.c.bf16 %v1808, %v1807
        %v1833 = vpack.c.bf16 %v1810, %v1809
        %v1834 = vpack.c.bf16 %v1812, %v1811
        %v1835 = vpack.c.bf16 %v1814, %v1813
        %v1836 = vpack.c.bf16 %v1816, %v1815
        %v1837 = vpack.c.bf16 %v1818, %v1817
        %v1838 = vpack.c.bf16 %v1820, %v1819
        %v1839 = vpack.c.bf16 %v1822, %v1821
        %v1840 = vpack.c.bf16 %v1824, %v1823
        %v1857 = vunpack.c.l.b16 %v1825
        %v1858 = vunpack.c.h.b16 %v1825
        %v1859 = vunpack.c.l.b16 %v1826
        %v1860 = vunpack.c.h.b16 %v1826
        %v1861 = vunpack.c.l.b16 %v1827
        %v1862 = vunpack.c.h.b16 %v1827
        %v1863 = vunpack.c.l.b16 %v1828
        %v1864 = vunpack.c.h.b16 %v1828
        %v1865 = vunpack.c.l.b16 %v1829
        %v1866 = vunpack.c.h.b16 %v1829
        %v1867 = vunpack.c.l.b16 %v1830
        %v1868 = vunpack.c.h.b16 %v1830
        %v1869 = vunpack.c.l.b16 %v1831
        %v1870 = vunpack.c.h.b16 %v1831
        %v1871 = vunpack.c.l.b16 %v1832
        %v1872 = vunpack.c.h.b16 %v1832
        %v1873 = vunpack.c.l.b16 %v1833
        %v1874 = vunpack.c.h.b16 %v1833
        %v1875 = vunpack.c.l.b16 %v1834
        %v1876 = vunpack.c.h.b16 %v1834
        %v1877 = vunpack.c.l.b16 %v1835
        %v1878 = vunpack.c.h.b16 %v1835
        %v1879 = vunpack.c.l.b16 %v1836
        %v1880 = vunpack.c.h.b16 %v1836
        %v1881 = vunpack.c.l.b16 %v1837
        %v1882 = vunpack.c.h.b16 %v1837
        %v1883 = vunpack.c.l.b16 %v1838
        %v1884 = vunpack.c.h.b16 %v1838
        %v1885 = vunpack.c.l.b16 %v1839
        %v1886 = vunpack.c.h.b16 %v1839
        %v1887 = vunpack.c.l.b16 %v1840
        %v1888 = vunpack.c.h.b16 %v1840
        %v1889 = vpack.c.b16 %v1857, %v1857
        %v1890 = vpack.c.b16 %v1858, %v1858
        %v1891 = vpack.c.b16 %v1859, %v1859
        %v1892 = vpack.c.b16 %v1860, %v1860
        %v1893 = vpack.c.b16 %v1861, %v1861
        %v1894 = vpack.c.b16 %v1862, %v1862
        %v1895 = vpack.c.b16 %v1863, %v1863
        %v1896 = vpack.c.b16 %v1864, %v1864
        %v1897 = vpack.c.b16 %v1865, %v1865
        %v1898 = vpack.c.b16 %v1866, %v1866
        %v1899 = vpack.c.b16 %v1867, %v1867
        %v1900 = vpack.c.b16 %v1868, %v1868
        %v1901 = vpack.c.b16 %v1869, %v1869
        %v1902 = vpack.c.b16 %v1870, %v1870
        %v1903 = vpack.c.b16 %v1871, %v1871
        %v1904 = vpack.c.b16 %v1872, %v1872
        %v1905 = vpack.c.b16 %v1873, %v1873
        %v1906 = vpack.c.b16 %v1874, %v1874
        %v1907 = vpack.c.b16 %v1875, %v1875
        %v1908 = vpack.c.b16 %v1876, %v1876
        %v1909 = vpack.c.b16 %v1877, %v1877
        %v1910 = vpack.c.b16 %v1878, %v1878
        %v1911 = vpack.c.b16 %v1879, %v1879
        %v1912 = vpack.c.b16 %v1880, %v1880
        %v1913 = vpack.c.b16 %v1881, %v1881
        %v1914 = vpack.c.b16 %v1882, %v1882
        %v1915 = vpack.c.b16 %v1883, %v1883
        %v1916 = vpack.c.b16 %v1884, %v1884
        %v1917 = vpack.c.b16 %v1885, %v1885
        %v1918 = vpack.c.b16 %v1886, %v1886
        %v1919 = vpack.c.b16 %v1887, %v1887
        %v1920 = vpack.c.b16 %v1888, %v1888
        %vm1953 = vcmask 519168
        %1954 = vst.msk [vmem:[%s253] sm:$0xf] %vm1953, %v1889
        %1955 = vst.msk [vmem:[%s253 + $0x4] sm:$0xf] %vm1953, %v1890
        %1956 = vst.msk [vmem:[%s253 + $0x8] sm:$0xf] %vm1953, %v1891
        %1957 = vst.msk [vmem:[%s253 + $0xc] sm:$0xf] %vm1953, %v1892
        %1958 = vst.msk [vmem:[%s253 + $0x10] sm:$0xf] %vm1953, %v1893
        %1959 = vst.msk [vmem:[%s253 + $0x14] sm:$0xf] %vm1953, %v1894
        %1960 = vst.msk [vmem:[%s253 + $0x18] sm:$0xf] %vm1953, %v1895
        %1961 = vst.msk [vmem:[%s253 + $0x1c] sm:$0xf] %vm1953, %v1896
        %1962 = vst.msk [vmem:[%s253 + $0x20] sm:$0xf] %vm1953, %v1897
        %1963 = vst.msk [vmem:[%s253 + $0x24] sm:$0xf] %vm1953, %v1898
        %1964 = vst.msk [vmem:[%s253 + $0x28] sm:$0xf] %vm1953, %v1899
        %1965 = vst.msk [vmem:[%s253 + $0x2c] sm:$0xf] %vm1953, %v1900
        %1966 = vst.msk [vmem:[%s253 + $0x30] sm:$0xf] %vm1953, %v1901
        %1967 = vst.msk [vmem:[%s253 + $0x34] sm:$0xf] %vm1953, %v1902
        %1968 = vst.msk [vmem:[%s253 + $0x38] sm:$0xf] %vm1953, %v1903
        %1969 = vst.msk [vmem:[%s253 + $0x3c] sm:$0xf] %vm1953, %v1904
        %1970 = vst.msk [vmem:[%s253 + $0x40] sm:$0xf] %vm1953, %v1905
        %1971 = vst.msk [vmem:[%s253 + $0x44] sm:$0xf] %vm1953, %v1906
        %1972 = vst.msk [vmem:[%s253 + $0x48] sm:$0xf] %vm1953, %v1907
        %1973 = vst.msk [vmem:[%s253 + $0x4c] sm:$0xf] %vm1953, %v1908
        %1974 = vst.msk [vmem:[%s253 + $0x50] sm:$0xf] %vm1953, %v1909
        %1975 = vst.msk [vmem:[%s253 + $0x54] sm:$0xf] %vm1953, %v1910
        %1976 = vst.msk [vmem:[%s253 + $0x58] sm:$0xf] %vm1953, %v1911
        %1977 = vst.msk [vmem:[%s253 + $0x5c] sm:$0xf] %vm1953, %v1912
        %1978 = vst.msk [vmem:[%s253 + $0x60] sm:$0xf] %vm1953, %v1913
        %1979 = vst.msk [vmem:[%s253 + $0x64] sm:$0xf] %vm1953, %v1914
        %1980 = vst.msk [vmem:[%s253 + $0x68] sm:$0xf] %vm1953, %v1915
        %1981 = vst.msk [vmem:[%s253 + $0x6c] sm:$0xf] %vm1953, %v1916
        %1982 = vst.msk [vmem:[%s253 + $0x70] sm:$0xf] %vm1953, %v1917
        %1983 = vst.msk [vmem:[%s253 + $0x74] sm:$0xf] %vm1953, %v1918
        %1984 = vst.msk [vmem:[%s253 + $0x78] sm:$0xf] %vm1953, %v1919
        %1985 = vst.msk [vmem:[%s253 + $0x7c] sm:$0xf] %vm1953, %v1920
        %s1986 = sand.u32 %s130, 1
        %s1987 = scalar_lea.sflag [#allocation4], %s1986
        %s1988 = sand.u32 %s130, 1
        %s1989 = smul.addr %s1988, 128
        %s1990 = scalar_lea.vmem [#allocation8], %s1989
        // Predicated region
        $region45: #{tpu_custom_call.1} parent=31 // pred_check
          %p1991 = pneg %p140
        $region46: #{tpu_custom_call.1} parent=31 // pred_check_branch
          %1993 = sbr.rel (%p1991) target = $region48
        $region47: #{tpu_custom_call.1} parent=31 // pred_region
          %s1994 = sadd.s32 %s26, %s27
          %s1995 = smul.u32 32, %s1994
          %s1997 = ssub.s32 2048, 2048
          %1998 = vsyncadd %s1987, %s1997
          %s1999 = sadd.s32 %s28, %s1995
          %s2000 = smul.addr %s1999, 64
          %s2001 = scalar_lea.hbm %s3, %s2000
          %s2002 = sshll.u32 %s1990, 4
          %s2003 = int_to_ptr.vmem [resolvable:$true] %s2002
          %2008 = dma.vmem_to_hbm [thread:$0]  %s2003, 2048, %s2001, %s1987, 64, 64, 4
        $region48: #{tpu_custom_call.1} parent=31 // pred_fallthru
          _
      $region32: #{tpu_custom_call.1} parent=5 // pred_fallthru
        _
      %p2009 = scmp.le.s32.totalorder 2, %s16
      // Predicated region
      $region49: #{tpu_custom_call.1} parent=5 // pred_check
        %p2010 = pneg %p2009
      $region50: #{tpu_custom_call.1} parent=5 // pred_check_branch
        %2012 = sbr.rel (%p2010) target = $region52
      $region51: #{tpu_custom_call.1} parent=5 // pred_region
        %s2013 = ssub.s32 %s16, 2
        // Predicated region
        $region53: #{tpu_custom_call.1} parent=51 // pred_check
          %p2014 = pneg %p146
        $region54: #{tpu_custom_call.1} parent=51 // pred_check_branch
          %2016 = sbr.rel (%p2014) target = $region56
        $region55: #{tpu_custom_call.1} parent=51 // pred_region
          %s2017 = sand.u32 %s131, 1
          %s2018 = scalar_lea.sflag [#allocation4], %s2017
          %s2019 = sand.u32 %s131, 1
          %s2020 = smul.addr %s2019, 128
          %s2021 = scalar_lea.vmem [#allocation8], %s2020
          %2022 = dma.done %s2018, 2048
        $region56: #{tpu_custom_call.1} parent=51 // pred_fallthru
          _
      $region52: #{tpu_custom_call.1} parent=5 // pred_fallthru
        _
    $region6: #{tpu_custom_call.1} parent=1 // loop_footer
      %s20 = sadd.s32 1, %s16
    $region7: #{tpu_custom_call.1} parent=1 // loop_footer_branch
      %15 = sbr.rel target = $region3
    $region8: #{tpu_custom_call.1} parent=1 // loop_exit
      _
    %2023 = vsyncpa [#allocation3], 1
    %s2024 = scalar_lea.sflag [#allocation3], 1
    %2025 = vsyncpa %s2024, 1
    %2026 = vsyncpa [#allocation6], 1
    %2027 = vsyncpa [#allocation4], 1
    %s2028 = scalar_lea.sflag [#allocation4], 1
    %2029 = vsyncpa %s2028, 1

</llo_original>
